<compile_context>
chip_gen: v5e
topology: v5e:2x2
jax: 0.10.0
libtpu: 0.0.40
codegen_flags: <defaults>
</compile_context>

<pallas_src>
import functools

import jax
import jax.numpy as jnp
import numpy as np
from jax.experimental import pallas as pl
from jax.experimental.pallas import tpu as pltpu


def _largest_divisor_leq(n, cap):
    for d in range(min(n, cap), 0, -1):
        if n % d == 0:
            return d
    return 1


# ----------------------------------------------------------------------------
# Projection kernels (big batched matmuls, no time recurrence).
# ----------------------------------------------------------------------------
def _proj_x_kernel(x_ref, w_ref, b_ref, o_ref):
    # x_ref: (TT, B, nIn)  w_ref: (nIn, N)  b_ref: (1, N)  o_ref: (TT, B, N)
    tt, b, nin = x_ref.shape
    x2 = x_ref[...].reshape(tt * b, nin)
    g = jnp.dot(x2, w_ref[...], preferred_element_type=jnp.float32) + b_ref[...]
    o_ref[...] = g.reshape(tt, b, -1)


def _proj_bi_kernel(h_ref, wf_ref, wb_ref, b_ref, o_ref):
    # h_ref: (2, TT, B, H)  wf/wb: (H, N)  b: (1, N)  o: (TT, B, N)
    # Equivalent to concat([fwd, bwd], -1) @ W^T + b, without materializing the concat.
    _, tt, b, hh = h_ref.shape
    f2 = h_ref[0].reshape(tt * b, hh)
    r2 = h_ref[1].reshape(tt * b, hh)
    g = (jnp.dot(f2, wf_ref[...], preferred_element_type=jnp.float32)
         + jnp.dot(r2, wb_ref[...], preferred_element_type=jnp.float32)
         + b_ref[...])
    o_ref[...] = g.reshape(tt, b, -1)


def project_input(x, w, b, *, tile_t):
    T, B, nin = x.shape
    N = w.shape[1]
    return pl.pallas_call(
        _proj_x_kernel,
        out_shape=jax.ShapeDtypeStruct((T, B, N), jnp.float32),
        grid_spec=pltpu.PrefetchScalarGridSpec(
            num_scalar_prefetch=0,
            grid=(T // tile_t,),
            in_specs=[
                pl.BlockSpec((tile_t, B, nin), lambda t: (t, 0, 0)),
                pl.BlockSpec((nin, N), lambda t: (0, 0)),
                pl.BlockSpec((1, N), lambda t: (0, 0)),
            ],
            out_specs=pl.BlockSpec((tile_t, B, N), lambda t: (t, 0, 0)),
        ),
        compiler_params=pltpu.CompilerParams(dimension_semantics=("parallel",)),
    )(x, w, b)


def project_bidir(h, wf, wb, b, *, tile_t):
    _, T, B, H = h.shape
    N = wf.shape[1]
    return pl.pallas_call(
        _proj_bi_kernel,
        out_shape=jax.ShapeDtypeStruct((T, B, N), jnp.float32),
        grid_spec=pltpu.PrefetchScalarGridSpec(
            num_scalar_prefetch=0,
            grid=(T // tile_t,),
            in_specs=[
                pl.BlockSpec((2, tile_t, B, H), lambda t: (0, t, 0, 0)),
                pl.BlockSpec((H, N), lambda t: (0, 0)),
                pl.BlockSpec((H, N), lambda t: (0, 0)),
                pl.BlockSpec((1, N), lambda t: (0, 0)),
            ],
            out_specs=pl.BlockSpec((tile_t, B, N), lambda t: (t, 0, 0)),
        ),
        compiler_params=pltpu.CompilerParams(dimension_semantics=("parallel",)),
    )(h, wf, wb, b)


# ----------------------------------------------------------------------------
# Fused bidirectional recurrence: grid = (direction, time_chunks).
# Direction axis is "parallel" (2 TCs on v7x take one direction each); time axis
# "arbitrary" (sequential recurrence). h/c carried in VMEM scratch across chunks.
# ----------------------------------------------------------------------------
def _bilstm_recurrent_kernel(gates_ref, whh_ref, out_ref, h_scr, c_scr, *,
                             hidden, ts):
    d = pl.program_id(0)     # 0 = forward, 1 = reverse
    tc = pl.program_id(1)    # time-chunk counter (chunks already reversed for d==1)

    @pl.when(tc == 0)
    def _():
        h_scr[...] = jnp.zeros_like(h_scr)
        c_scr[...] = jnp.zeros_like(c_scr)

    whh = whh_ref[...]       # (H, 4H), resident for the whole chunk

    def step(s, carry):
        # Local index inside the chunk: forward walks 0..ts-1, reverse ts-1..0.
        li = d * (ts - 1 - s) + (1 - d) * s
        g = gates_ref[li] + jnp.dot(h_scr[...], whh,
                                    preferred_element_type=jnp.float32)  # (B, 4H)
        i = jax.nn.sigmoid(g[:, 0 * hidden:1 * hidden])
        f = jax.nn.sigmoid(g[:, 1 * hidden:2 * hidden])
        gg = jnp.tanh(g[:, 2 * hidden:3 * hidden])
        o = jax.nn.sigmoid(g[:, 3 * hidden:4 * hidden])
        c_new = f * c_scr[...] + i * gg
        h_new = o * jnp.tanh(c_new)
        c_scr[...] = c_new
        h_scr[...] = h_new
        out_ref[li] = h_new
        return carry

    jax.lax.fori_loop(0, ts, step, 0, unroll=True)


def bilstm_recurrence(gates, w_hh_stacked, *, hidden, chunk):
    """gates: (T, B, 8H) [fwd gates | rev gates]; w_hh_stacked: (2, H, 4H).
    Returns (2, T, B, H): [forward outputs, reverse outputs]."""
    T, B, _ = gates.shape
    n_chunks = T // chunk

    def gates_map(dd, tc):
        t_blk = dd * (n_chunks - 1 - tc) + (1 - dd) * tc
        return (t_blk, 0, dd)                       # last axis picks 4H slice per dir

    def out_map(dd, tc):
        t_blk = dd * (n_chunks - 1 - tc) + (1 - dd) * tc
        return (dd, t_blk, 0, 0)

    kernel = functools.partial(_bilstm_recurrent_kernel, hidden=hidden, ts=chunk)
    return pl.pallas_call(
        kernel,
        out_shape=jax.ShapeDtypeStruct((2, T, B, hidden), jnp.float32),
        grid_spec=pltpu.PrefetchScalarGridSpec(
            num_scalar_prefetch=0,
            grid=(2, n_chunks),
            in_specs=[
                pl.BlockSpec((chunk, B, 4 * hidden), gates_map),
                pl.BlockSpec((None, hidden, 4 * hidden), lambda dd, tc: (dd, 0, 0)),
            ],
            out_specs=pl.BlockSpec((None, chunk, B, hidden), out_map),
            scratch_shapes=[
                pltpu.VMEM((B, hidden), jnp.float32),   # h
                pltpu.VMEM((B, hidden), jnp.float32),   # c
            ],
        ),
        compiler_params=pltpu.CompilerParams(
            dimension_semantics=("parallel", "arbitrary")),
    )(gates, w_hh_stacked)


# ----------------------------------------------------------------------------
# Full module forward
# ----------------------------------------------------------------------------
def bidirectional_lstm_forward(x, params, *, hidden):
    T, B, _ = x.shape
    H = hidden

    chunk = _largest_divisor_leq(T, 32)                      # timesteps per grid step
    tile_t = _largest_divisor_leq(T, max(1, 512 // max(B, 1)))  # projection M tile

    # ---- weight glue (one-time transposes/concats, outside kernels) ----
    # Layer 1 gate projection: [W_ih_fwd^T | W_ih_rev^T] -> (nIn, 8H)
    w1 = jnp.concatenate([params["w_ih_l0"].T, params["w_ih_l0_rev"].T], axis=1)
    b1 = jnp.concatenate([params["b_l0"], params["b_l0_rev"]], axis=1)
    whh1 = jnp.stack([params["w_hh_l0"].T, params["w_hh_l0_rev"].T], axis=0)

    # Layer 2 gate projection, weight split by source direction (avoids concat of h1).
    w2f = jnp.concatenate([params["w_ih_l1"][:, :H].T,
                           params["w_ih_l1_rev"][:, :H].T], axis=1)
    w2b = jnp.concatenate([params["w_ih_l1"][:, H:].T,
                           params["w_ih_l1_rev"][:, H:].T], axis=1)
    b2 = jnp.concatenate([params["b_l1"], params["b_l1_rev"]], axis=1)
    whh2 = jnp.stack([params["w_hh_l1"].T, params["w_hh_l1_rev"].T], axis=0)

    # Final embedding, weight split by source direction.
    wef = params["emb_w"][:, :H].T
    web = params["emb_w"][:, H:].T
    be = params["emb_b"].reshape(1, -1)

    # ---- layer 1 ----
    gates1 = project_input(x, w1, b1, tile_t=tile_t)              # (T, B, 8H)
    h1 = bilstm_recurrence(gates1, whh1, hidden=H, chunk=chunk)    # (2, T, B, H)

    # ---- layer 2 (inter-layer dropout(0.5) is identity in inference mode) ----
    gates2 = project_bidir(h1, w2f, w2b, b2, tile_t=tile_t)        # (T, B, 8H)
    h2 = bilstm_recurrence(gates2, whh2, hidden=H, chunk=chunk)    # (2, T, B, H)

    # ---- final Linear fused over both directions (no concat / reshape copy) ----
    out = project_bidir(h2, wef, web, be, tile_t=tile_t)           # (T, B, nOut)
    return out


# ----------------------------------------------------------------------------
# Deterministic parameter init (PyTorch-style uniform(-1/sqrt(H), 1/sqrt(H)))
# ----------------------------------------------------------------------------
def init_params(key, n_in, hidden, n_out):
    params = {}
    k_lstm = 1.0 / float(np.sqrt(hidden))
    keys = jax.random.split(key, 64)
    idx = 0

    def u(kk, shape, bound):
        return jax.random.uniform(kk, shape, jnp.float32, -bound, bound)

    for layer in range(2):
        in_size = n_in if layer == 0 else 2 * hidden
        for suffix in ("", "_rev"):
            params[f"w_ih_l{layer}{suffix}"] = u(keys[idx], (4 * hidden, in_size), k_lstm); idx += 1
            params[f"w_hh_l{layer}{suffix}"] = u(keys[idx], (4 * hidden, hidden), k_lstm); idx += 1
            b_ih = u(keys[idx], (4 * hidden,), k_lstm); idx += 1
            b_hh = u(keys[idx], (4 * hidden,), k_lstm); idx += 1
            params[f"b_l{layer}{suffix}"] = (b_ih + b_hh).reshape(1, 4 * hidden)

    k_lin = 1.0 / float(np.sqrt(2 * hidden))
    params["emb_w"] = u(keys[idx], (n_out, 2 * hidden), k_lin); idx += 1
    params["emb_b"] = u(keys[idx], (n_out,), k_lin); idx += 1
    return params


# ----------------------------------------------------------------------------
# Pure-JAX reference (lax.scan) for correctness check
# ----------------------------------------------------------------------------
def _lstm_layer_ref(x, w_ih, w_hh, b, hidden, reverse):
    T, B, _ = x.shape
    xs = x[::-1] if reverse else x

    def step(carry, x_t):
        h, c = carry
        gates = x_t @ w_ih.T + h @ w_hh.T + b
        i = jax.nn.sigmoid(gates[:, :hidden])
        f = jax.nn.sigmoid(gates[:, hidden:2 * hidden])
        g = jnp.tanh(gates[:, 2 * hidden:3 * hidden])
        o = jax.nn.sigmoid(gates[:, 3 * hidden:])
        c = f * c + i * g
        h = o * jnp.tanh(c)
        return (h, c), h

    init = (jnp.zeros((B, hidden), jnp.float32), jnp.zeros((B, hidden), jnp.float32))
    _, ys = jax.lax.scan(step, init, xs)
    return ys[::-1] if reverse else ys


def model_ref(x, params, hidden):
    h = x
    for layer in range(2):
        fwd = _lstm_layer_ref(h, params[f"w_ih_l{layer}"], params[f"w_hh_l{layer}"],
                              params[f"b_l{layer}"], hidden, False)
        bwd = _lstm_layer_ref(h, params[f"w_ih_l{layer}_rev"], params[f"w_hh_l{layer}_rev"],
                              params[f"b_l{layer}_rev"], hidden, True)
        h = jnp.concatenate([fwd, bwd], axis=-1)
    T, B, hh = h.shape
    out = h.reshape(T * B, hh) @ params["emb_w"].T + params["emb_b"]
    return out.reshape(T, B, -1)


if __name__ == "__main__":
    T, B, n_in, hidden, n_out = 8, 2, 16, 32, 16
    key = jax.random.PRNGKey(0)
    kx, kp = jax.random.split(key)
    x = jax.random.normal(kx, (T, B, n_in), jnp.float32)
    params = init_params(kp, n_in, hidden, n_out)

    fwd_fn = jax.jit(functools.partial(bidirectional_lstm_forward, hidden=hidden))
    out = fwd_fn(x, params)
    out = jax.block_until_ready(out)

    ref = model_ref(x, params, hidden)
    np.testing.assert_allclose(np.asarray(out), np.asarray(ref), rtol=2e-2, atol=2e-2)
    assert out.shape == (T, B, n_out)
    print("KERNEL_OK")
</pallas_src>

<mosaic_0001>
module attributes {stable_mosaic.version = 11 : i64} {
  func.func @_proj_x_kernel(%arg0: i32, %arg1: memref<8x2x16xf32, #tpu.memory_space<vmem>>, %arg2: memref<16x256xf32, #tpu.memory_space<vmem>>, %arg3: memref<1x256xf32, #tpu.memory_space<vmem>>, %arg4: memref<8x2x256xf32, #tpu.memory_space<vmem>>) attributes {dimension_semantics = [#tpu.dimension_semantics<parallel>], iteration_bounds = array<i64: 1>, scalar_prefetch = 0 : i64, scratch_operands = 0 : i64, tpu.core_type = #tpu.core_type<tc>, window_params = [{transform_indices = @transform_0, window_bounds = array<i64: 8, 2, 16>}, {pipeline_mode = #tpu.pipeline_mode<synchronous>, transform_indices = @transform_1, window_bounds = array<i64: 16, 256>}, {pipeline_mode = #tpu.pipeline_mode<synchronous>, transform_indices = @transform_2, window_bounds = array<i64: 1, 256>}, {transform_indices = @transform_3, window_bounds = array<i64: 8, 2, 256>}]} {
    %c0 = arith.constant 0 : index
    %c0_0 = arith.constant 0 : index
    %c0_1 = arith.constant 0 : index
    %0 = vector.load %arg1[%c0, %c0_0, %c0_1] : memref<8x2x16xf32, #tpu.memory_space<vmem>>, vector<8x2x16xf32>
    %1 = vector.shape_cast %0 : vector<8x2x16xf32> to vector<16x16xf32>
    %c0_2 = arith.constant 0 : index
    %c0_3 = arith.constant 0 : index
    %2 = vector.load %arg2[%c0_2, %c0_3] : memref<16x256xf32, #tpu.memory_space<vmem>>, vector<16x256xf32>
    %cst = arith.constant dense<0.000000e+00> : vector<16x256xf32>
    %3 = tpu.matmul %1, %2, %cst {dimension_numbers = #tpu.dot_dimension_numbers<[1], [0], [0], [1], [0, 0, 1, 1], [], []>} : vector<16x16xf32>, vector<16x256xf32>, vector<16x256xf32> -> vector<16x256xf32>
    %c0_4 = arith.constant 0 : index
    %c0_5 = arith.constant 0 : index
    %4 = vector.load %arg3[%c0_4, %c0_5] : memref<1x256xf32, #tpu.memory_space<vmem>>, vector<1x256xf32>
    %5 = vector.broadcast %4 : vector<1x256xf32> to vector<16x256xf32>
    %6 = arith.addf %3, %5 : vector<16x256xf32>
    %7 = vector.shape_cast %6 : vector<16x256xf32> to vector<8x2x256xf32>
    %c0_6 = arith.constant 0 : index
    %c0_7 = arith.constant 0 : index
    %c0_8 = arith.constant 0 : index
    %8 = vector.load %arg4[%c0_6, %c0_7, %c0_8] : memref<8x2x256xf32, #tpu.memory_space<vmem>>, vector<8x2x256xf32>
    tpu.vector_store %arg4[%c0_6, %c0_7, %c0_8], %7 {strides = array<i32>} : memref<8x2x256xf32, #tpu.memory_space<vmem>>, vector<8x2x256xf32>,
    return
  }
  func.func @transform_0(%arg0: i32) -> (i32, i32, i32) {
    %c0_i32 = arith.constant 0 : i32
    %c0_i32_0 = arith.constant 0 : i32
    %c0_i32_1 = arith.constant 0 : i32
    return %arg0, %c0_i32, %c0_i32_0 : i32, i32, i32
  }
  func.func @transform_1(%arg0: i32) -> (i32, i32) {
    %c0_i32 = arith.constant 0 : i32
    %c0_i32_0 = arith.constant 0 : i32
    %c0_i32_1 = arith.constant 0 : i32
    return %c0_i32, %c0_i32_0 : i32, i32
  }
  func.func @transform_2(%arg0: i32) -> (i32, i32) {
    %c0_i32 = arith.constant 0 : i32
    %c0_i32_0 = arith.constant 0 : i32
    %c0_i32_1 = arith.constant 0 : i32
    return %c0_i32, %c0_i32_0 : i32, i32
  }
  func.func @transform_3(%arg0: i32) -> (i32, i32, i32) {
    %c0_i32 = arith.constant 0 : i32
    %c0_i32_0 = arith.constant 0 : i32
    %c0_i32_1 = arith.constant 0 : i32
    return %arg0, %c0_i32, %c0_i32_0 : i32, i32, i32
  }
}

module attributes {stable_mosaic.version = 11 : i64} {
  func.func @_proj_bi_kernel(%arg0: i32, %arg1: memref<2x8x2x32xf32, #tpu.memory_space<vmem>>, %arg2: memref<32x256xf32, #tpu.memory_space<vmem>>, %arg3: memref<32x256xf32, #tpu.memory_space<vmem>>, %arg4: memref<1x256xf32, #tpu.memory_space<vmem>>, %arg5: memref<8x2x256xf32, #tpu.memory_space<vmem>>) attributes {dimension_semantics = [#tpu.dimension_semantics<parallel>], iteration_bounds = array<i64: 1>, scalar_prefetch = 0 : i64, scratch_operands = 0 : i64, tpu.core_type = #tpu.core_type<tc>, window_params = [{transform_indices = @transform_0, window_bounds = array<i64: 2, 8, 2, 32>}, {pipeline_mode = #tpu.pipeline_mode<synchronous>, transform_indices = @transform_1, window_bounds = array<i64: 32, 256>}, {pipeline_mode = #tpu.pipeline_mode<synchronous>, transform_indices = @transform_2, window_bounds = array<i64: 32, 256>}, {pipeline_mode = #tpu.pipeline_mode<synchronous>, transform_indices = @transform_3, window_bounds = array<i64: 1, 256>}, {transform_indices = @transform_4, window_bounds = array<i64: 8, 2, 256>}]} {
    %c0 = arith.constant 0 : index
    %c0_0 = arith.constant 0 : index
    %c0_1 = arith.constant 0 : index
    %c0_2 = arith.constant 0 : index
    %0 = vector.load %arg1[%c0, %c0_0, %c0_1, %c0_2] : memref<2x8x2x32xf32, #tpu.memory_space<vmem>>, vector<1x8x2x32xf32>
    %1 = vector.shape_cast %0 : vector<1x8x2x32xf32> to vector<8x2x32xf32>
    %2 = vector.shape_cast %1 : vector<8x2x32xf32> to vector<16x32xf32>
    %c1 = arith.constant 1 : index
    %c0_3 = arith.constant 0 : index
    %c0_4 = arith.constant 0 : index
    %c0_5 = arith.constant 0 : index
    %3 = vector.load %arg1[%c1, %c0_3, %c0_4, %c0_5] : memref<2x8x2x32xf32, #tpu.memory_space<vmem>>, vector<1x8x2x32xf32>
    %4 = vector.shape_cast %3 : vector<1x8x2x32xf32> to vector<8x2x32xf32>
    %5 = vector.shape_cast %4 : vector<8x2x32xf32> to vector<16x32xf32>
    %c0_6 = arith.constant 0 : index
    %c0_7 = arith.constant 0 : index
    %6 = vector.load %arg2[%c0_6, %c0_7] : memref<32x256xf32, #tpu.memory_space<vmem>>, vector<32x256xf32>
    %cst = arith.constant dense<0.000000e+00> : vector<16x256xf32>
    %7 = tpu.matmul %2, %6, %cst {dimension_numbers = #tpu.dot_dimension_numbers<[1], [0], [0], [1], [0, 0, 1, 1], [], []>} : vector<16x32xf32>, vector<32x256xf32>, vector<16x256xf32> -> vector<16x256xf32>
    %c0_8 = arith.constant 0 : index
    %c0_9 = arith.constant 0 : index
    %8 = vector.load %arg3[%c0_8, %c0_9] : memref<32x256xf32, #tpu.memory_space<vmem>>, vector<32x256xf32>
    %cst_10 = arith.constant dense<0.000000e+00> : vector<16x256xf32>
    %9 = tpu.matmul %5, %8, %cst_10 {dimension_numbers = #tpu.dot_dimension_numbers<[1], [0], [0], [1], [0, 0, 1, 1], [], []>} : vector<16x32xf32>, vector<32x256xf32>, vector<16x256xf32> -> vector<16x256xf32>
    %10 = arith.addf %7, %9 : vector<16x256xf32>
    %c0_11 = arith.constant 0 : index
    %c0_12 = arith.constant 0 : index
    %11 = vector.load %arg4[%c0_11, %c0_12] : memref<1x256xf32, #tpu.memory_space<vmem>>, vector<1x256xf32>
    %12 = vector.broadcast %11 : vector<1x256xf32> to vector<16x256xf32>
    %13 = arith.addf %10, %12 : vector<16x256xf32>
    %14 = vector.shape_cast %13 : vector<16x256xf32> to vector<8x2x256xf32>
    %c0_13 = arith.constant 0 : index
    %c0_14 = arith.constant 0 : index
    %c0_15 = arith.constant 0 : index
    %15 = vector.load %arg5[%c0_13, %c0_14, %c0_15] : memref<8x2x256xf32, #tpu.memory_space<vmem>>, vector<8x2x256xf32>
    tpu.vector_store %arg5[%c0_13, %c0_14, %c0_15], %14 {strides = array<i32>} : memref<8x2x256xf32, #tpu.memory_space<vmem>>, vector<8x2x256xf32>,
    return
  }
  func.func @transform_0(%arg0: i32) -> (i32, i32, i32, i32) {
    %c0_i32 = arith.constant 0 : i32
    %c0_i32_0 = arith.constant 0 : i32
    %c0_i32_1 = arith.constant 0 : i32
    %c0_i32_2 = arith.constant 0 : i32
    return %c0_i32, %arg0, %c0_i32_0, %c0_i32_1 : i32, i32, i32, i32
  }
  func.func @transform_1(%arg0: i32) -> (i32, i32) {
    %c0_i32 = arith.constant 0 : i32
    %c0_i32_0 = arith.constant 0 : i32
    %c0_i32_1 = arith.constant 0 : i32
    return %c0_i32, %c0_i32_0 : i32, i32
  }
  func.func @transform_2(%arg0: i32) -> (i32, i32) {
    %c0_i32 = arith.constant 0 : i32
    %c0_i32_0 = arith.constant 0 : i32
    %c0_i32_1 = arith.constant 0 : i32
    return %c0_i32, %c0_i32_0 : i32, i32
  }
  func.func @transform_3(%arg0: i32) -> (i32, i32) {
    %c0_i32 = arith.constant 0 : i32
    %c0_i32_0 = arith.constant 0 : i32
    %c0_i32_1 = arith.constant 0 : i32
    return %c0_i32, %c0_i32_0 : i32, i32
  }
  func.func @transform_4(%arg0: i32) -> (i32, i32, i32) {
    %c0_i32 = arith.constant 0 : i32
    %c0_i32_0 = arith.constant 0 : i32
    %c0_i32_1 = arith.constant 0 : i32
    return %arg0, %c0_i32, %c0_i32_0 : i32, i32, i32
  }
}

module attributes {stable_mosaic.version = 11 : i64} {
  func.func @_bilstm_recurrent_kernel(%arg0: i32, %arg1: i32, %arg2: memref<8x2x128xf32, #tpu.memory_space<vmem>>, %arg3: memref<1x32x128xf32, #tpu.memory_space<vmem>>, %arg4: memref<1x8x2x32xf32, #tpu.memory_space<vmem>>, %arg5: memref<2x32xf32, #tpu.memory_space<vmem>>, %arg6: memref<2x32xf32, #tpu.memory_space<vmem>>) attributes {dimension_semantics = [#tpu.dimension_semantics<parallel>, #tpu.dimension_semantics<arbitrary>], iteration_bounds = array<i64: 2, 1>, scalar_prefetch = 0 : i64, scratch_operands = 2 : i64, tpu.core_type = #tpu.core_type<tc>, window_params = [{transform_indices = @transform_0, window_bounds = array<i64: 8, 2, 128>}, {transform_indices = @transform_1, window_bounds = array<i64: 1, 32, 128>}, {transform_indices = @transform_2, window_bounds = array<i64: 1, 8, 2, 32>}]} {
    %c0_i32 = arith.constant 0 : i32
    %0 = arith.cmpi eq, %arg1, %c0_i32 : i32
    %1 = arith.extui %0 : i1 to i32
    %c0_i32_0 = arith.constant 0 : i32
    %2 = arith.cmpi ne, %1, %c0_i32_0 : i32
    scf.if %2 {
      %cst_155 = arith.constant 0.000000e+00 : f32
      %349 = vector.broadcast %cst_155 : f32 to vector<2x32xf32>
      %c0_156 = arith.constant 0 : index
      %c0_157 = arith.constant 0 : index
      %350 = vector.load %arg5[%c0_156, %c0_157] : memref<2x32xf32, #tpu.memory_space<vmem>>, vector<2x32xf32>
      tpu.vector_store %arg5[%c0_156, %c0_157], %349 {strides = array<i32>} : memref<2x32xf32, #tpu.memory_space<vmem>>, vector<2x32xf32>,
      %cst_158 = arith.constant 0.000000e+00 : f32
      %351 = vector.broadcast %cst_158 : f32 to vector<2x32xf32>
      %c0_159 = arith.constant 0 : index
      %c0_160 = arith.constant 0 : index
      %352 = vector.load %arg6[%c0_159, %c0_160] : memref<2x32xf32, #tpu.memory_space<vmem>>, vector<2x32xf32>
      tpu.vector_store %arg6[%c0_159, %c0_160], %351 {strides = array<i32>} : memref<2x32xf32, #tpu.memory_space<vmem>>, vector<2x32xf32>,
    } else {
    }
    %c0 = arith.constant 0 : index
    %c0_1 = arith.constant 0 : index
    %c0_2 = arith.constant 0 : index
    %3 = vector.load %arg3[%c0, %c0_1, %c0_2] : memref<1x32x128xf32, #tpu.memory_space<vmem>>, vector<1x32x128xf32>
    %4 = vector.shape_cast %3 : vector<1x32x128xf32> to vector<32x128xf32>
    %c0_i32_3 = arith.constant 0 : i32
    %c7_i32 = arith.constant 7 : i32
    %5 = arith.subi %c7_i32, %c0_i32_3 : i32
    %6 = arith.muli %arg0, %5 : i32
    %c1_i32 = arith.constant 1 : i32
    %7 = arith.subi %c1_i32, %arg0 : i32
    %8 = arith.muli %7, %c0_i32_3 : i32
    %9 = arith.addi %6, %8 : i32
    %10 = arith.index_cast %9 : i32 to index
    %c0_4 = arith.constant 0 : index
    %c0_5 = arith.constant 0 : index
    %11 = vector.load %arg2[%10, %c0_4, %c0_5] : memref<8x2x128xf32, #tpu.memory_space<vmem>>, vector<1x2x128xf32>
    %12 = vector.shape_cast %11 : vector<1x2x128xf32> to vector<2x128xf32>
    %c0_6 = arith.constant 0 : index
    %c0_7 = arith.constant 0 : index
    %13 = vector.load %arg5[%c0_6, %c0_7] : memref<2x32xf32, #tpu.memory_space<vmem>>, vector<2x32xf32>
    %cst = arith.constant dense<0.000000e+00> : vector<2x128xf32>
    %14 = tpu.matmul %13, %4, %cst {dimension_numbers = #tpu.dot_dimension_numbers<[1], [0], [0], [1], [0, 0, 1, 1], [], []>} : vector<2x32xf32>, vector<32x128xf32>, vector<2x128xf32> -> vector<2x128xf32>
    %15 = arith.addf %12, %14 : vector<2x128xf32>
    %16 = vector.extract_strided_slice %15 {offsets = [0, 0], sizes = [2, 32], strides = [1, 1]} : vector<2x128xf32> to vector<2x32xf32>
    %17 = arith.negf %16 : vector<2x32xf32>
    %18 = math.exp %17 : vector<2x32xf32>
    %cst_8 = arith.constant 1.000000e+00 : f32
    %19 = vector.broadcast %cst_8 : f32 to vector<2x32xf32>
    %20 = arith.addf %19, %18 : vector<2x32xf32>
    %21 = arith.divf %19, %20 : vector<2x32xf32>
    %22 = vector.extract_strided_slice %15 {offsets = [0, 32], sizes = [2, 32], strides = [1, 1]} : vector<2x128xf32> to vector<2x32xf32>
    %23 = arith.negf %22 : vector<2x32xf32>
    %24 = math.exp %23 : vector<2x32xf32>
    %cst_9 = arith.constant 1.000000e+00 : f32
    %25 = vector.broadcast %cst_9 : f32 to vector<2x32xf32>
    %26 = arith.addf %25, %24 : vector<2x32xf32>
    %27 = arith.divf %25, %26 : vector<2x32xf32>
    %28 = vector.extract_strided_slice %15 {offsets = [0, 64], sizes = [2, 32], strides = [1, 1]} : vector<2x128xf32> to vector<2x32xf32>
    %29 = math.tanh %28 : vector<2x32xf32>
    %30 = vector.extract_strided_slice %15 {offsets = [0, 96], sizes = [2, 32], strides = [1, 1]} : vector<2x128xf32> to vector<2x32xf32>
    %31 = arith.negf %30 : vector<2x32xf32>
    %32 = math.exp %31 : vector<2x32xf32>
    %cst_10 = arith.constant 1.000000e+00 : f32
    %33 = vector.broadcast %cst_10 : f32 to vector<2x32xf32>
    %34 = arith.addf %33, %32 : vector<2x32xf32>
    %35 = arith.divf %33, %34 : vector<2x32xf32>
    %c0_11 = arith.constant 0 : index
    %c0_12 = arith.constant 0 : index
    %36 = vector.load %arg6[%c0_11, %c0_12] : memref<2x32xf32, #tpu.memory_space<vmem>>, vector<2x32xf32>
    %37 = arith.mulf %27, %36 : vector<2x32xf32>
    %38 = arith.mulf %21, %29 : vector<2x32xf32>
    %39 = arith.addf %37, %38 : vector<2x32xf32>
    %40 = math.tanh %39 : vector<2x32xf32>
    %41 = arith.mulf %35, %40 : vector<2x32xf32>
    %c0_13 = arith.constant 0 : index
    %c0_14 = arith.constant 0 : index
    %42 = vector.load %arg6[%c0_13, %c0_14] : memref<2x32xf32, #tpu.memory_space<vmem>>, vector<2x32xf32>
    tpu.vector_store %arg6[%c0_13, %c0_14], %39 {strides = array<i32>} : memref<2x32xf32, #tpu.memory_space<vmem>>, vector<2x32xf32>,
    %c0_15 = arith.constant 0 : index
    %c0_16 = arith.constant 0 : index
    %43 = vector.load %arg5[%c0_15, %c0_16] : memref<2x32xf32, #tpu.memory_space<vmem>>, vector<2x32xf32>
    tpu.vector_store %arg5[%c0_15, %c0_16], %41 {strides = array<i32>} : memref<2x32xf32, #tpu.memory_space<vmem>>, vector<2x32xf32>,
    %c0_17 = arith.constant 0 : index
    %44 = arith.index_cast %9 : i32 to index
    %c0_18 = arith.constant 0 : index
    %c0_19 = arith.constant 0 : index
    %45 = vector.load %arg4[%c0_17, %44, %c0_18, %c0_19] : memref<1x8x2x32xf32, #tpu.memory_space<vmem>>, vector<1x1x2x32xf32>
    %46 = vector.shape_cast %45 : vector<1x1x2x32xf32> to vector<2x32xf32>
    %47 = vector.shape_cast %41 : vector<2x32xf32> to vector<1x1x2x32xf32>
    tpu.vector_store %arg4[%c0_17, %44, %c0_18, %c0_19], %47 {strides = array<i32>} : memref<1x8x2x32xf32, #tpu.memory_space<vmem>>, vector<1x1x2x32xf32>,
    %c1_i32_20 = arith.constant 1 : i32
    %c7_i32_21 = arith.constant 7 : i32
    %48 = arith.subi %c7_i32_21, %c1_i32_20 : i32
    %49 = arith.muli %arg0, %48 : i32
    %c1_i32_22 = arith.constant 1 : i32
    %50 = arith.subi %c1_i32_22, %arg0 : i32
    %51 = arith.muli %50, %c1_i32_20 : i32
    %52 = arith.addi %49, %51 : i32
    %53 = arith.index_cast %52 : i32 to index
    %c0_23 = arith.constant 0 : index
    %c0_24 = arith.constant 0 : index
    %54 = vector.load %arg2[%53, %c0_23, %c0_24] : memref<8x2x128xf32, #tpu.memory_space<vmem>>, vector<1x2x128xf32>
    %55 = vector.shape_cast %54 : vector<1x2x128xf32> to vector<2x128xf32>
    %c0_25 = arith.constant 0 : index
    %c0_26 = arith.constant 0 : index
    %56 = vector.load %arg5[%c0_25, %c0_26] : memref<2x32xf32, #tpu.memory_space<vmem>>, vector<2x32xf32>
    %cst_27 = arith.constant dense<0.000000e+00> : vector<2x128xf32>
    %57 = tpu.matmul %56, %4, %cst_27 {dimension_numbers = #tpu.dot_dimension_numbers<[1], [0], [0], [1], [0, 0, 1, 1], [], []>} : vector<2x32xf32>, vector<32x128xf32>, vector<2x128xf32> -> vector<2x128xf32>
    %58 = arith.addf %55, %57 : vector<2x128xf32>
    %59 = vector.extract_strided_slice %58 {offsets = [0, 0], sizes = [2, 32], strides = [1, 1]} : vector<2x128xf32> to vector<2x32xf32>
    %60 = arith.negf %59 : vector<2x32xf32>
    %61 = math.exp %60 : vector<2x32xf32>
    %cst_28 = arith.constant 1.000000e+00 : f32
    %62 = vector.broadcast %cst_28 : f32 to vector<2x32xf32>
    %63 = arith.addf %62, %61 : vector<2x32xf32>
    %64 = arith.divf %62, %63 : vector<2x32xf32>
    %65 = vector.extract_strided_slice %58 {offsets = [0, 32], sizes = [2, 32], strides = [1, 1]} : vector<2x128xf32> to vector<2x32xf32>
    %66 = arith.negf %65 : vector<2x32xf32>
    %67 = math.exp %66 : vector<2x32xf32>
    %cst_29 = arith.constant 1.000000e+00 : f32
    %68 = vector.broadcast %cst_29 : f32 to vector<2x32xf32>
    %69 = arith.addf %68, %67 : vector<2x32xf32>
    %70 = arith.divf %68, %69 : vector<2x32xf32>
    %71 = vector.extract_strided_slice %58 {offsets = [0, 64], sizes = [2, 32], strides = [1, 1]} : vector<2x128xf32> to vector<2x32xf32>
    %72 = math.tanh %71 : vector<2x32xf32>
    %73 = vector.extract_strided_slice %58 {offsets = [0, 96], sizes = [2, 32], strides = [1, 1]} : vector<2x128xf32> to vector<2x32xf32>
    %74 = arith.negf %73 : vector<2x32xf32>
    %75 = math.exp %74 : vector<2x32xf32>
    %cst_30 = arith.constant 1.000000e+00 : f32
    %76 = vector.broadcast %cst_30 : f32 to vector<2x32xf32>
    %77 = arith.addf %76, %75 : vector<2x32xf32>
    %78 = arith.divf %76, %77 : vector<2x32xf32>
    %c0_31 = arith.constant 0 : index
    %c0_32 = arith.constant 0 : index
    %79 = vector.load %arg6[%c0_31, %c0_32] : memref<2x32xf32, #tpu.memory_space<vmem>>, vector<2x32xf32>
    %80 = arith.mulf %70, %79 : vector<2x32xf32>
    %81 = arith.mulf %64, %72 : vector<2x32xf32>
    %82 = arith.addf %80, %81 : vector<2x32xf32>
    %83 = math.tanh %82 : vector<2x32xf32>
    %84 = arith.mulf %78, %83 : vector<2x32xf32>
    %c0_33 = arith.constant 0 : index
    %c0_34 = arith.constant 0 : index
    %85 = vector.load %arg6[%c0_33, %c0_34] : memref<2x32xf32, #tpu.memory_space<vmem>>, vector<2x32xf32>
    tpu.vector_store %arg6[%c0_33, %c0_34], %82 {strides = array<i32>} : memref<2x32xf32, #tpu.memory_space<vmem>>, vector<2x32xf32>,
    %c0_35 = arith.constant 0 : index
    %c0_36 = arith.constant 0 : index
    %86 = vector.load %arg5[%c0_35, %c0_36] : memref<2x32xf32, #tpu.memory_space<vmem>>, vector<2x32xf32>
    tpu.vector_store %arg5[%c0_35, %c0_36], %84 {strides = array<i32>} : memref<2x32xf32, #tpu.memory_space<vmem>>, vector<2x32xf32>,
    %c0_37 = arith.constant 0 : index
    %87 = arith.index_cast %52 : i32 to index
    %c0_38 = arith.constant 0 : index
    %c0_39 = arith.constant 0 : index
    %88 = vector.load %arg4[%c0_37, %87, %c0_38, %c0_39] : memref<1x8x2x32xf32, #tpu.memory_space<vmem>>, vector<1x1x2x32xf32>
    %89 = vector.shape_cast %88 : vector<1x1x2x32xf32> to vector<2x32xf32>
    %90 = vector.shape_cast %84 : vector<2x32xf32> to vector<1x1x2x32xf32>
    tpu.vector_store %arg4[%c0_37, %87, %c0_38, %c0_39], %90 {strides = array<i32>} : memref<1x8x2x32xf32, #tpu.memory_space<vmem>>, vector<1x1x2x32xf32>,
    %c2_i32 = arith.constant 2 : i32
    %c7_i32_40 = arith.constant 7 : i32
    %91 = arith.subi %c7_i32_40, %c2_i32 : i32
    %92 = arith.muli %arg0, %91 : i32
    %c1_i32_41 = arith.constant 1 : i32
    %93 = arith.subi %c1_i32_41, %arg0 : i32
    %94 = arith.muli %93, %c2_i32 : i32
    %95 = arith.addi %92, %94 : i32
    %96 = arith.index_cast %95 : i32 to index
    %c0_42 = arith.constant 0 : index
    %c0_43 = arith.constant 0 : index
    %97 = vector.load %arg2[%96, %c0_42, %c0_43] : memref<8x2x128xf32, #tpu.memory_space<vmem>>, vector<1x2x128xf32>
    %98 = vector.shape_cast %97 : vector<1x2x128xf32> to vector<2x128xf32>
    %c0_44 = arith.constant 0 : index
    %c0_45 = arith.constant 0 : index
    %99 = vector.load %arg5[%c0_44, %c0_45] : memref<2x32xf32, #tpu.memory_space<vmem>>, vector<2x32xf32>
    %cst_46 = arith.constant dense<0.000000e+00> : vector<2x128xf32>
    %100 = tpu.matmul %99, %4, %cst_46 {dimension_numbers = #tpu.dot_dimension_numbers<[1], [0], [0], [1], [0, 0, 1, 1], [], []>} : vector<2x32xf32>, vector<32x128xf32>, vector<2x128xf32> -> vector<2x128xf32>
    %101 = arith.addf %98, %100 : vector<2x128xf32>
    %102 = vector.extract_strided_slice %101 {offsets = [0, 0], sizes = [2, 32], strides = [1, 1]} : vector<2x128xf32> to vector<2x32xf32>
    %103 = arith.negf %102 : vector<2x32xf32>
    %104 = math.exp %103 : vector<2x32xf32>
    %cst_47 = arith.constant 1.000000e+00 : f32
    %105 = vector.broadcast %cst_47 : f32 to vector<2x32xf32>
    %106 = arith.addf %105, %104 : vector<2x32xf32>
    %107 = arith.divf %105, %106 : vector<2x32xf32>
    %108 = vector.extract_strided_slice %101 {offsets = [0, 32], sizes = [2, 32], strides = [1, 1]} : vector<2x128xf32> to vector<2x32xf32>
    %109 = arith.negf %108 : vector<2x32xf32>
    %110 = math.exp %109 : vector<2x32xf32>
    %cst_48 = arith.constant 1.000000e+00 : f32
    %111 = vector.broadcast %cst_48 : f32 to vector<2x32xf32>
    %112 = arith.addf %111, %110 : vector<2x32xf32>
    %113 = arith.divf %111, %112 : vector<2x32xf32>
    %114 = vector.extract_strided_slice %101 {offsets = [0, 64], sizes = [2, 32], strides = [1, 1]} : vector<2x128xf32> to vector<2x32xf32>
    %115 = math.tanh %114 : vector<2x32xf32>
    %116 = vector.extract_strided_slice %101 {offsets = [0, 96], sizes = [2, 32], strides = [1, 1]} : vector<2x128xf32> to vector<2x32xf32>
    %117 = arith.negf %116 : vector<2x32xf32>
    %118 = math.exp %117 : vector<2x32xf32>
    %cst_49 = arith.constant 1.000000e+00 : f32
    %119 = vector.broadcast %cst_49 : f32 to vector<2x32xf32>
    %120 = arith.addf %119, %118 : vector<2x32xf32>
    %121 = arith.divf %119, %120 : vector<2x32xf32>
    %c0_50 = arith.constant 0 : index
    %c0_51 = arith.constant 0 : index
    %122 = vector.load %arg6[%c0_50, %c0_51] : memref<2x32xf32, #tpu.memory_space<vmem>>, vector<2x32xf32>
    %123 = arith.mulf %113, %122 : vector<2x32xf32>
    %124 = arith.mulf %107, %115 : vector<2x32xf32>
    %125 = arith.addf %123, %124 : vector<2x32xf32>
    %126 = math.tanh %125 : vector<2x32xf32>
    %127 = arith.mulf %121, %126 : vector<2x32xf32>
    %c0_52 = arith.constant 0 : index
    %c0_53 = arith.constant 0 : index
    %128 = vector.load %arg6[%c0_52, %c0_53] : memref<2x32xf32, #tpu.memory_space<vmem>>, vector<2x32xf32>
    tpu.vector_store %arg6[%c0_52, %c0_53], %125 {strides = array<i32>} : memref<2x32xf32, #tpu.memory_space<vmem>>, vector<2x32xf32>,
    %c0_54 = arith.constant 0 : index
    %c0_55 = arith.constant 0 : index
    %129 = vector.load %arg5[%c0_54, %c0_55] : memref<2x32xf32, #tpu.memory_space<vmem>>, vector<2x32xf32>
    tpu.vector_store %arg5[%c0_54, %c0_55], %127 {strides = array<i32>} : memref<2x32xf32, #tpu.memory_space<vmem>>, vector<2x32xf32>,
    %c0_56 = arith.constant 0 : index
    %130 = arith.index_cast %95 : i32 to index
    %c0_57 = arith.constant 0 : index
    %c0_58 = arith.constant 0 : index
    %131 = vector.load %arg4[%c0_56, %130, %c0_57, %c0_58] : memref<1x8x2x32xf32, #tpu.memory_space<vmem>>, vector<1x1x2x32xf32>
    %132 = vector.shape_cast %131 : vector<1x1x2x32xf32> to vector<2x32xf32>
    %133 = vector.shape_cast %127 : vector<2x32xf32> to vector<1x1x2x32xf32>
    tpu.vector_store %arg4[%c0_56, %130, %c0_57, %c0_58], %133 {strides = array<i32>} : memref<1x8x2x32xf32, #tpu.memory_space<vmem>>, vector<1x1x2x32xf32>,
    %c3_i32 = arith.constant 3 : i32
    %c7_i32_59 = arith.constant 7 : i32
    %134 = arith.subi %c7_i32_59, %c3_i32 : i32
    %135 = arith.muli %arg0, %134 : i32
    %c1_i32_60 = arith.constant 1 : i32
    %136 = arith.subi %c1_i32_60, %arg0 : i32
    %137 = arith.muli %136, %c3_i32 : i32
    %138 = arith.addi %135, %137 : i32
    %139 = arith.index_cast %138 : i32 to index
    %c0_61 = arith.constant 0 : index
    %c0_62 = arith.constant 0 : index
    %140 = vector.load %arg2[%139, %c0_61, %c0_62] : memref<8x2x128xf32, #tpu.memory_space<vmem>>, vector<1x2x128xf32>
    %141 = vector.shape_cast %140 : vector<1x2x128xf32> to vector<2x128xf32>
    %c0_63 = arith.constant 0 : index
    %c0_64 = arith.constant 0 : index
    %142 = vector.load %arg5[%c0_63, %c0_64] : memref<2x32xf32, #tpu.memory_space<vmem>>, vector<2x32xf32>
    %cst_65 = arith.constant dense<0.000000e+00> : vector<2x128xf32>
    %143 = tpu.matmul %142, %4, %cst_65 {dimension_numbers = #tpu.dot_dimension_numbers<[1], [0], [0], [1], [0, 0, 1, 1], [], []>} : vector<2x32xf32>, vector<32x128xf32>, vector<2x128xf32> -> vector<2x128xf32>
    %144 = arith.addf %141, %143 : vector<2x128xf32>
    %145 = vector.extract_strided_slice %144 {offsets = [0, 0], sizes = [2, 32], strides = [1, 1]} : vector<2x128xf32> to vector<2x32xf32>
    %146 = arith.negf %145 : vector<2x32xf32>
    %147 = math.exp %146 : vector<2x32xf32>
    %cst_66 = arith.constant 1.000000e+00 : f32
    %148 = vector.broadcast %cst_66 : f32 to vector<2x32xf32>
    %149 = arith.addf %148, %147 : vector<2x32xf32>
    %150 = arith.divf %148, %149 : vector<2x32xf32>
    %151 = vector.extract_strided_slice %144 {offsets = [0, 32], sizes = [2, 32], strides = [1, 1]} : vector<2x128xf32> to vector<2x32xf32>
    %152 = arith.negf %151 : vector<2x32xf32>
    %153 = math.exp %152 : vector<2x32xf32>
    %cst_67 = arith.constant 1.000000e+00 : f32
    %154 = vector.broadcast %cst_67 : f32 to vector<2x32xf32>
    %155 = arith.addf %154, %153 : vector<2x32xf32>
    %156 = arith.divf %154, %155 : vector<2x32xf32>
    %157 = vector.extract_strided_slice %144 {offsets = [0, 64], sizes = [2, 32], strides = [1, 1]} : vector<2x128xf32> to vector<2x32xf32>
    %158 = math.tanh %157 : vector<2x32xf32>
    %159 = vector.extract_strided_slice %144 {offsets = [0, 96], sizes = [2, 32], strides = [1, 1]} : vector<2x128xf32> to vector<2x32xf32>
    %160 = arith.negf %159 : vector<2x32xf32>
    %161 = math.exp %160 : vector<2x32xf32>
    %cst_68 = arith.constant 1.000000e+00 : f32
    %162 = vector.broadcast %cst_68 : f32 to vector<2x32xf32>
    %163 = arith.addf %162, %161 : vector<2x32xf32>
    %164 = arith.divf %162, %163 : vector<2x32xf32>
    %c0_69 = arith.constant 0 : index
    %c0_70 = arith.constant 0 : index
    %165 = vector.load %arg6[%c0_69, %c0_70] : memref<2x32xf32, #tpu.memory_space<vmem>>, vector<2x32xf32>
    %166 = arith.mulf %156, %165 : vector<2x32xf32>
    %167 = arith.mulf %150, %158 : vector<2x32xf32>
    %168 = arith.addf %166, %167 : vector<2x32xf32>
    %169 = math.tanh %168 : vector<2x32xf32>
    %170 = arith.mulf %164, %169 : vector<2x32xf32>
    %c0_71 = arith.constant 0 : index
    %c0_72 = arith.constant 0 : index
    %171 = vector.load %arg6[%c0_71, %c0_72] : memref<2x32xf32, #tpu.memory_space<vmem>>, vector<2x32xf32>
    tpu.vector_store %arg6[%c0_71, %c0_72], %168 {strides = array<i32>} : memref<2x32xf32, #tpu.memory_space<vmem>>, vector<2x32xf32>,
    %c0_73 = arith.constant 0 : index
    %c0_74 = arith.constant 0 : index
    %172 = vector.load %arg5[%c0_73, %c0_74] : memref<2x32xf32, #tpu.memory_space<vmem>>, vector<2x32xf32>
    tpu.vector_store %arg5[%c0_73, %c0_74], %170 {strides = array<i32>} : memref<2x32xf32, #tpu.memory_space<vmem>>, vector<2x32xf32>,
    %c0_75 = arith.constant 0 : index
    %173 = arith.index_cast %138 : i32 to index
    %c0_76 = arith.constant 0 : index
    %c0_77 = arith.constant 0 : index
    %174 = vector.load %arg4[%c0_75, %173, %c0_76, %c0_77] : memref<1x8x2x32xf32, #tpu.memory_space<vmem>>, vector<1x1x2x32xf32>
    %175 = vector.shape_cast %174 : vector<1x1x2x32xf32> to vector<2x32xf32>
    %176 = vector.shape_cast %170 : vector<2x32xf32> to vector<1x1x2x32xf32>
    tpu.vector_store %arg4[%c0_75, %173, %c0_76, %c0_77], %176 {strides = array<i32>} : memref<1x8x2x32xf32, #tpu.memory_space<vmem>>, vector<1x1x2x32xf32>,
    %c4_i32 = arith.constant 4 : i32
    %c7_i32_78 = arith.constant 7 : i32
    %177 = arith.subi %c7_i32_78, %c4_i32 : i32
    %178 = arith.muli %arg0, %177 : i32
    %c1_i32_79 = arith.constant 1 : i32
    %179 = arith.subi %c1_i32_79, %arg0 : i32
    %180 = arith.muli %179, %c4_i32 : i32
    %181 = arith.addi %178, %180 : i32
    %182 = arith.index_cast %181 : i32 to index
    %c0_80 = arith.constant 0 : index
    %c0_81 = arith.constant 0 : index
    %183 = vector.load %arg2[%182, %c0_80, %c0_81] : memref<8x2x128xf32, #tpu.memory_space<vmem>>, vector<1x2x128xf32>
    %184 = vector.shape_cast %183 : vector<1x2x128xf32> to vector<2x128xf32>
    %c0_82 = arith.constant 0 : index
    %c0_83 = arith.constant 0 : index
    %185 = vector.load %arg5[%c0_82, %c0_83] : memref<2x32xf32, #tpu.memory_space<vmem>>, vector<2x32xf32>
    %cst_84 = arith.constant dense<0.000000e+00> : vector<2x128xf32>
    %186 = tpu.matmul %185, %4, %cst_84 {dimension_numbers = #tpu.dot_dimension_numbers<[1], [0], [0], [1], [0, 0, 1, 1], [], []>} : vector<2x32xf32>, vector<32x128xf32>, vector<2x128xf32> -> vector<2x128xf32>
    %187 = arith.addf %184, %186 : vector<2x128xf32>
    %188 = vector.extract_strided_slice %187 {offsets = [0, 0], sizes = [2, 32], strides = [1, 1]} : vector<2x128xf32> to vector<2x32xf32>
    %189 = arith.negf %188 : vector<2x32xf32>
    %190 = math.exp %189 : vector<2x32xf32>
    %cst_85 = arith.constant 1.000000e+00 : f32
    %191 = vector.broadcast %cst_85 : f32 to vector<2x32xf32>
    %192 = arith.addf %191, %190 : vector<2x32xf32>
    %193 = arith.divf %191, %192 : vector<2x32xf32>
    %194 = vector.extract_strided_slice %187 {offsets = [0, 32], sizes = [2, 32], strides = [1, 1]} : vector<2x128xf32> to vector<2x32xf32>
    %195 = arith.negf %194 : vector<2x32xf32>
    %196 = math.exp %195 : vector<2x32xf32>
    %cst_86 = arith.constant 1.000000e+00 : f32
    %197 = vector.broadcast %cst_86 : f32 to vector<2x32xf32>
    %198 = arith.addf %197, %196 : vector<2x32xf32>
    %199 = arith.divf %197, %198 : vector<2x32xf32>
    %200 = vector.extract_strided_slice %187 {offsets = [0, 64], sizes = [2, 32], strides = [1, 1]} : vector<2x128xf32> to vector<2x32xf32>
    %201 = math.tanh %200 : vector<2x32xf32>
    %202 = vector.extract_strided_slice %187 {offsets = [0, 96], sizes = [2, 32], strides = [1, 1]} : vector<2x128xf32> to vector<2x32xf32>
    %203 = arith.negf %202 : vector<2x32xf32>
    %204 = math.exp %203 : vector<2x32xf32>
    %cst_87 = arith.constant 1.000000e+00 : f32
    %205 = vector.broadcast %cst_87 : f32 to vector<2x32xf32>
    %206 = arith.addf %205, %204 : vector<2x32xf32>
    %207 = arith.divf %205, %206 : vector<2x32xf32>
    %c0_88 = arith.constant 0 : index
    %c0_89 = arith.constant 0 : index
    %208 = vector.load %arg6[%c0_88, %c0_89] : memref<2x32xf32, #tpu.memory_space<vmem>>, vector<2x32xf32>
    %209 = arith.mulf %199, %208 : vector<2x32xf32>
    %210 = arith.mulf %193, %201 : vector<2x32xf32>
    %211 = arith.addf %209, %210 : vector<2x32xf32>
    %212 = math.tanh %211 : vector<2x32xf32>
    %213 = arith.mulf %207, %212 : vector<2x32xf32>
    %c0_90 = arith.constant 0 : index
    %c0_91 = arith.constant 0 : index
    %214 = vector.load %arg6[%c0_90, %c0_91] : memref<2x32xf32, #tpu.memory_space<vmem>>, vector<2x32xf32>
    tpu.vector_store %arg6[%c0_90, %c0_91], %211 {strides = array<i32>} : memref<2x32xf32, #tpu.memory_space<vmem>>, vector<2x32xf32>,
    %c0_92 = arith.constant 0 : index
    %c0_93 = arith.constant 0 : index
    %215 = vector.load %arg5[%c0_92, %c0_93] : memref<2x32xf32, #tpu.memory_space<vmem>>, vector<2x32xf32>
    tpu.vector_store %arg5[%c0_92, %c0_93], %213 {strides = array<i32>} : memref<2x32xf32, #tpu.memory_space<vmem>>, vector<2x32xf32>,
    %c0_94 = arith.constant 0 : index
    %216 = arith.index_cast %181 : i32 to index
    %c0_95 = arith.constant 0 : index
    %c0_96 = arith.constant 0 : index
    %217 = vector.load %arg4[%c0_94, %216, %c0_95, %c0_96] : memref<1x8x2x32xf32, #tpu.memory_space<vmem>>, vector<1x1x2x32xf32>
    %218 = vector.shape_cast %217 : vector<1x1x2x32xf32> to vector<2x32xf32>
    %219 = vector.shape_cast %213 : vector<2x32xf32> to vector<1x1x2x32xf32>
    tpu.vector_store %arg4[%c0_94, %216, %c0_95, %c0_96], %219 {strides = array<i32>} : memref<1x8x2x32xf32, #tpu.memory_space<vmem>>, vector<1x1x2x32xf32>,
    %c5_i32 = arith.constant 5 : i32
    %c7_i32_97 = arith.constant 7 : i32
    %220 = arith.subi %c7_i32_97, %c5_i32 : i32
    %221 = arith.muli %arg0, %220 : i32
    %c1_i32_98 = arith.constant 1 : i32
    %222 = arith.subi %c1_i32_98, %arg0 : i32
    %223 = arith.muli %222, %c5_i32 : i32
    %224 = arith.addi %221, %223 : i32
    %225 = arith.index_cast %224 : i32 to index
    %c0_99 = arith.constant 0 : index
    %c0_100 = arith.constant 0 : index
    %226 = vector.load %arg2[%225, %c0_99, %c0_100] : memref<8x2x128xf32, #tpu.memory_space<vmem>>, vector<1x2x128xf32>
    %227 = vector.shape_cast %226 : vector<1x2x128xf32> to vector<2x128xf32>
    %c0_101 = arith.constant 0 : index
    %c0_102 = arith.constant 0 : index
    %228 = vector.load %arg5[%c0_101, %c0_102] : memref<2x32xf32, #tpu.memory_space<vmem>>, vector<2x32xf32>
    %cst_103 = arith.constant dense<0.000000e+00> : vector<2x128xf32>
    %229 = tpu.matmul %228, %4, %cst_103 {dimension_numbers = #tpu.dot_dimension_numbers<[1], [0], [0], [1], [0, 0, 1, 1], [], []>} : vector<2x32xf32>, vector<32x128xf32>, vector<2x128xf32> -> vector<2x128xf32>
    %230 = arith.addf %227, %229 : vector<2x128xf32>
    %231 = vector.extract_strided_slice %230 {offsets = [0, 0], sizes = [2, 32], strides = [1, 1]} : vector<2x128xf32> to vector<2x32xf32>
    %232 = arith.negf %231 : vector<2x32xf32>
    %233 = math.exp %232 : vector<2x32xf32>
    %cst_104 = arith.constant 1.000000e+00 : f32
    %234 = vector.broadcast %cst_104 : f32 to vector<2x32xf32>
    %235 = arith.addf %234, %233 : vector<2x32xf32>
    %236 = arith.divf %234, %235 : vector<2x32xf32>
    %237 = vector.extract_strided_slice %230 {offsets = [0, 32], sizes = [2, 32], strides = [1, 1]} : vector<2x128xf32> to vector<2x32xf32>
    %238 = arith.negf %237 : vector<2x32xf32>
    %239 = math.exp %238 : vector<2x32xf32>
    %cst_105 = arith.constant 1.000000e+00 : f32
    %240 = vector.broadcast %cst_105 : f32 to vector<2x32xf32>
    %241 = arith.addf %240, %239 : vector<2x32xf32>
    %242 = arith.divf %240, %241 : vector<2x32xf32>
    %243 = vector.extract_strided_slice %230 {offsets = [0, 64], sizes = [2, 32], strides = [1, 1]} : vector<2x128xf32> to vector<2x32xf32>
    %244 = math.tanh %243 : vector<2x32xf32>
    %245 = vector.extract_strided_slice %230 {offsets = [0, 96], sizes = [2, 32], strides = [1, 1]} : vector<2x128xf32> to vector<2x32xf32>
    %246 = arith.negf %245 : vector<2x32xf32>
    %247 = math.exp %246 : vector<2x32xf32>
    %cst_106 = arith.constant 1.000000e+00 : f32
    %248 = vector.broadcast %cst_106 : f32 to vector<2x32xf32>
    %249 = arith.addf %248, %247 : vector<2x32xf32>
    %250 = arith.divf %248, %249 : vector<2x32xf32>
    %c0_107 = arith.constant 0 : index
    %c0_108 = arith.constant 0 : index
    %251 = vector.load %arg6[%c0_107, %c0_108] : memref<2x32xf32, #tpu.memory_space<vmem>>, vector<2x32xf32>
    %252 = arith.mulf %242, %251 : vector<2x32xf32>
    %253 = arith.mulf %236, %244 : vector<2x32xf32>
    %254 = arith.addf %252, %253 : vector<2x32xf32>
    %255 = math.tanh %254 : vector<2x32xf32>
    %256 = arith.mulf %250, %255 : vector<2x32xf32>
    %c0_109 = arith.constant 0 : index
    %c0_110 = arith.constant 0 : index
    %257 = vector.load %arg6[%c0_109, %c0_110] : memref<2x32xf32, #tpu.memory_space<vmem>>, vector<2x32xf32>
    tpu.vector_store %arg6[%c0_109, %c0_110], %254 {strides = array<i32>} : memref<2x32xf32, #tpu.memory_space<vmem>>, vector<2x32xf32>,
    %c0_111 = arith.constant 0 : index
    %c0_112 = arith.constant 0 : index
    %258 = vector.load %arg5[%c0_111, %c0_112] : memref<2x32xf32, #tpu.memory_space<vmem>>, vector<2x32xf32>
    tpu.vector_store %arg5[%c0_111, %c0_112], %256 {strides = array<i32>} : memref<2x32xf32, #tpu.memory_space<vmem>>, vector<2x32xf32>,
    %c0_113 = arith.constant 0 : index
    %259 = arith.index_cast %224 : i32 to index
    %c0_114 = arith.constant 0 : index
    %c0_115 = arith.constant 0 : index
    %260 = vector.load %arg4[%c0_113, %259, %c0_114, %c0_115] : memref<1x8x2x32xf32, #tpu.memory_space<vmem>>, vector<1x1x2x32xf32>
    %261 = vector.shape_cast %260 : vector<1x1x2x32xf32> to vector<2x32xf32>
    %262 = vector.shape_cast %256 : vector<2x32xf32> to vector<1x1x2x32xf32>
    tpu.vector_store %arg4[%c0_113, %259, %c0_114, %c0_115], %262 {strides = array<i32>} : memref<1x8x2x32xf32, #tpu.memory_space<vmem>>, vector<1x1x2x32xf32>,
    %c6_i32 = arith.constant 6 : i32
    %c7_i32_116 = arith.constant 7 : i32
    %263 = arith.subi %c7_i32_116, %c6_i32 : i32
    %264 = arith.muli %arg0, %263 : i32
    %c1_i32_117 = arith.constant 1 : i32
    %265 = arith.subi %c1_i32_117, %arg0 : i32
    %266 = arith.muli %265, %c6_i32 : i32
    %267 = arith.addi %264, %266 : i32
    %268 = arith.index_cast %267 : i32 to index
    %c0_118 = arith.constant 0 : index
    %c0_119 = arith.constant 0 : index
    %269 = vector.load %arg2[%268, %c0_118, %c0_119] : memref<8x2x128xf32, #tpu.memory_space<vmem>>, vector<1x2x128xf32>
    %270 = vector.shape_cast %269 : vector<1x2x128xf32> to vector<2x128xf32>
    %c0_120 = arith.constant 0 : index
    %c0_121 = arith.constant 0 : index
    %271 = vector.load %arg5[%c0_120, %c0_121] : memref<2x32xf32, #tpu.memory_space<vmem>>, vector<2x32xf32>
    %cst_122 = arith.constant dense<0.000000e+00> : vector<2x128xf32>
    %272 = tpu.matmul %271, %4, %cst_122 {dimension_numbers = #tpu.dot_dimension_numbers<[1], [0], [0], [1], [0, 0, 1, 1], [], []>} : vector<2x32xf32>, vector<32x128xf32>, vector<2x128xf32> -> vector<2x128xf32>
    %273 = arith.addf %270, %272 : vector<2x128xf32>
    %274 = vector.extract_strided_slice %273 {offsets = [0, 0], sizes = [2, 32], strides = [1, 1]} : vector<2x128xf32> to vector<2x32xf32>
    %275 = arith.negf %274 : vector<2x32xf32>
    %276 = math.exp %275 : vector<2x32xf32>
    %cst_123 = arith.constant 1.000000e+00 : f32
    %277 = vector.broadcast %cst_123 : f32 to vector<2x32xf32>
    %278 = arith.addf %277, %276 : vector<2x32xf32>
    %279 = arith.divf %277, %278 : vector<2x32xf32>
    %280 = vector.extract_strided_slice %273 {offsets = [0, 32], sizes = [2, 32], strides = [1, 1]} : vector<2x128xf32> to vector<2x32xf32>
    %281 = arith.negf %280 : vector<2x32xf32>
    %282 = math.exp %281 : vector<2x32xf32>
    %cst_124 = arith.constant 1.000000e+00 : f32
    %283 = vector.broadcast %cst_124 : f32 to vector<2x32xf32>
    %284 = arith.addf %283, %282 : vector<2x32xf32>
    %285 = arith.divf %283, %284 : vector<2x32xf32>
    %286 = vector.extract_strided_slice %273 {offsets = [0, 64], sizes = [2, 32], strides = [1, 1]} : vector<2x128xf32> to vector<2x32xf32>
    %287 = math.tanh %286 : vector<2x32xf32>
    %288 = vector.extract_strided_slice %273 {offsets = [0, 96], sizes = [2, 32], strides = [1, 1]} : vector<2x128xf32> to vector<2x32xf32>
    %289 = arith.negf %288 : vector<2x32xf32>
    %290 = math.exp %289 : vector<2x32xf32>
    %cst_125 = arith.constant 1.000000e+00 : f32
    %291 = vector.broadcast %cst_125 : f32 to vector<2x32xf32>
    %292 = arith.addf %291, %290 : vector<2x32xf32>
    %293 = arith.divf %291, %292 : vector<2x32xf32>
    %c0_126 = arith.constant 0 : index
    %c0_127 = arith.constant 0 : index
    %294 = vector.load %arg6[%c0_126, %c0_127] : memref<2x32xf32, #tpu.memory_space<vmem>>, vector<2x32xf32>
    %295 = arith.mulf %285, %294 : vector<2x32xf32>
    %296 = arith.mulf %279, %287 : vector<2x32xf32>
    %297 = arith.addf %295, %296 : vector<2x32xf32>
    %298 = math.tanh %297 : vector<2x32xf32>
    %299 = arith.mulf %293, %298 : vector<2x32xf32>
    %c0_128 = arith.constant 0 : index
    %c0_129 = arith.constant 0 : index
    %300 = vector.load %arg6[%c0_128, %c0_129] : memref<2x32xf32, #tpu.memory_space<vmem>>, vector<2x32xf32>
    tpu.vector_store %arg6[%c0_128, %c0_129], %297 {strides = array<i32>} : memref<2x32xf32, #tpu.memory_space<vmem>>, vector<2x32xf32>,
    %c0_130 = arith.constant 0 : index
    %c0_131 = arith.constant 0 : index
    %301 = vector.load %arg5[%c0_130, %c0_131] : memref<2x32xf32, #tpu.memory_space<vmem>>, vector<2x32xf32>
    tpu.vector_store %arg5[%c0_130, %c0_131], %299 {strides = array<i32>} : memref<2x32xf32, #tpu.memory_space<vmem>>, vector<2x32xf32>,
    %c0_132 = arith.constant 0 : index
    %302 = arith.index_cast %267 : i32 to index
    %c0_133 = arith.constant 0 : index
    %c0_134 = arith.constant 0 : index
    %303 = vector.load %arg4[%c0_132, %302, %c0_133, %c0_134] : memref<1x8x2x32xf32, #tpu.memory_space<vmem>>, vector<1x1x2x32xf32>
    %304 = vector.shape_cast %303 : vector<1x1x2x32xf32> to vector<2x32xf32>
    %305 = vector.shape_cast %299 : vector<2x32xf32> to vector<1x1x2x32xf32>
    tpu.vector_store %arg4[%c0_132, %302, %c0_133, %c0_134], %305 {strides = array<i32>} : memref<1x8x2x32xf32, #tpu.memory_space<vmem>>, vector<1x1x2x32xf32>,
    %c7_i32_135 = arith.constant 7 : i32
    %c7_i32_136 = arith.constant 7 : i32
    %306 = arith.subi %c7_i32_136, %c7_i32_135 : i32
    %307 = arith.muli %arg0, %306 : i32
    %c1_i32_137 = arith.constant 1 : i32
    %308 = arith.subi %c1_i32_137, %arg0 : i32
    %309 = arith.muli %308, %c7_i32_135 : i32
    %310 = arith.addi %307, %309 : i32
    %311 = arith.index_cast %310 : i32 to index
    %c0_138 = arith.constant 0 : index
    %c0_139 = arith.constant 0 : index
    %312 = vector.load %arg2[%311, %c0_138, %c0_139] : memref<8x2x128xf32, #tpu.memory_space<vmem>>, vector<1x2x128xf32>
    %313 = vector.shape_cast %312 : vector<1x2x128xf32> to vector<2x128xf32>
    %c0_140 = arith.constant 0 : index
    %c0_141 = arith.constant 0 : index
    %314 = vector.load %arg5[%c0_140, %c0_141] : memref<2x32xf32, #tpu.memory_space<vmem>>, vector<2x32xf32>
    %cst_142 = arith.constant dense<0.000000e+00> : vector<2x128xf32>
    %315 = tpu.matmul %314, %4, %cst_142 {dimension_numbers = #tpu.dot_dimension_numbers<[1], [0], [0], [1], [0, 0, 1, 1], [], []>} : vector<2x32xf32>, vector<32x128xf32>, vector<2x128xf32> -> vector<2x128xf32>
    %316 = arith.addf %313, %315 : vector<2x128xf32>
    %317 = vector.extract_strided_slice %316 {offsets = [0, 0], sizes = [2, 32], strides = [1, 1]} : vector<2x128xf32> to vector<2x32xf32>
    %318 = arith.negf %317 : vector<2x32xf32>
    %319 = math.exp %318 : vector<2x32xf32>
    %cst_143 = arith.constant 1.000000e+00 : f32
    %320 = vector.broadcast %cst_143 : f32 to vector<2x32xf32>
    %321 = arith.addf %320, %319 : vector<2x32xf32>
    %322 = arith.divf %320, %321 : vector<2x32xf32>
    %323 = vector.extract_strided_slice %316 {offsets = [0, 32], sizes = [2, 32], strides = [1, 1]} : vector<2x128xf32> to vector<2x32xf32>
    %324 = arith.negf %323 : vector<2x32xf32>
    %325 = math.exp %324 : vector<2x32xf32>
    %cst_144 = arith.constant 1.000000e+00 : f32
    %326 = vector.broadcast %cst_144 : f32 to vector<2x32xf32>
    %327 = arith.addf %326, %325 : vector<2x32xf32>
    %328 = arith.divf %326, %327 : vector<2x32xf32>
    %329 = vector.extract_strided_slice %316 {offsets = [0, 64], sizes = [2, 32], strides = [1, 1]} : vector<2x128xf32> to vector<2x32xf32>
    %330 = math.tanh %329 : vector<2x32xf32>
    %331 = vector.extract_strided_slice %316 {offsets = [0, 96], sizes = [2, 32], strides = [1, 1]} : vector<2x128xf32> to vector<2x32xf32>
    %332 = arith.negf %331 : vector<2x32xf32>
    %333 = math.exp %332 : vector<2x32xf32>
    %cst_145 = arith.constant 1.000000e+00 : f32
    %334 = vector.broadcast %cst_145 : f32 to vector<2x32xf32>
    %335 = arith.addf %334, %333 : vector<2x32xf32>
    %336 = arith.divf %334, %335 : vector<2x32xf32>
    %c0_146 = arith.constant 0 : index
    %c0_147 = arith.constant 0 : index
    %337 = vector.load %arg6[%c0_146, %c0_147] : memref<2x32xf32, #tpu.memory_space<vmem>>, vector<2x32xf32>
    %338 = arith.mulf %328, %337 : vector<2x32xf32>
    %339 = arith.mulf %322, %330 : vector<2x32xf32>
    %340 = arith.addf %338, %339 : vector<2x32xf32>
    %341 = math.tanh %340 : vector<2x32xf32>
    %342 = arith.mulf %336, %341 : vector<2x32xf32>
    %c0_148 = arith.constant 0 : index
    %c0_149 = arith.constant 0 : index
    %343 = vector.load %arg6[%c0_148, %c0_149] : memref<2x32xf32, #tpu.memory_space<vmem>>, vector<2x32xf32>
    tpu.vector_store %arg6[%c0_148, %c0_149], %340 {strides = array<i32>} : memref<2x32xf32, #tpu.memory_space<vmem>>, vector<2x32xf32>,
    %c0_150 = arith.constant 0 : index
    %c0_151 = arith.constant 0 : index
    %344 = vector.load %arg5[%c0_150, %c0_151] : memref<2x32xf32, #tpu.memory_space<vmem>>, vector<2x32xf32>
    tpu.vector_store %arg5[%c0_150, %c0_151], %342 {strides = array<i32>} : memref<2x32xf32, #tpu.memory_space<vmem>>, vector<2x32xf32>,
    %c0_152 = arith.constant 0 : index
    %345 = arith.index_cast %310 : i32 to index
    %c0_153 = arith.constant 0 : index
    %c0_154 = arith.constant 0 : index
    %346 = vector.load %arg4[%c0_152, %345, %c0_153, %c0_154] : memref<1x8x2x32xf32, #tpu.memory_space<vmem>>, vector<1x1x2x32xf32>
    %347 = vector.shape_cast %346 : vector<1x1x2x32xf32> to vector<2x32xf32>
    %348 = vector.shape_cast %342 : vector<2x32xf32> to vector<1x1x2x32xf32>
    tpu.vector_store %arg4[%c0_152, %345, %c0_153, %c0_154], %348 {strides = array<i32>} : memref<1x8x2x32xf32, #tpu.memory_space<vmem>>, vector<1x1x2x32xf32>,
    %c8_i32 = arith.constant 8 : i32
    return
  }
  func.func @transform_0(%arg0: i32, %arg1: i32) -> (i32, i32, i32) {
    %c0_i32 = arith.constant 0 : i32
    %0 = arith.subi %c0_i32, %arg1 : i32
    %1 = arith.muli %arg0, %0 : i32
    %c1_i32 = arith.constant 1 : i32
    %2 = arith.subi %c1_i32, %arg0 : i32
    %3 = arith.muli %2, %arg1 : i32
    %4 = arith.addi %1, %3 : i32
    %c0_i32_0 = arith.constant 0 : i32
    %c0_i32_1 = arith.constant 0 : i32
    return %4, %c0_i32_0, %arg0 : i32, i32, i32
  }
  func.func @transform_1(%arg0: i32, %arg1: i32) -> (i32, i32, i32) {
    %c0_i32 = arith.constant 0 : i32
    %c0_i32_0 = arith.constant 0 : i32
    %c0_i32_1 = arith.constant 0 : i32
    return %arg0, %c0_i32, %c0_i32_0 : i32, i32, i32
  }
  func.func @transform_2(%arg0: i32, %arg1: i32) -> (i32, i32, i32, i32) {
    %c0_i32 = arith.constant 0 : i32
    %0 = arith.subi %c0_i32, %arg1 : i32
    %1 = arith.muli %arg0, %0 : i32
    %c1_i32 = arith.constant 1 : i32
    %2 = arith.subi %c1_i32, %arg0 : i32
    %3 = arith.muli %2, %arg1 : i32
    %4 = arith.addi %1, %3 : i32
    %c0_i32_0 = arith.constant 0 : i32
    %c0_i32_1 = arith.constant 0 : i32
    %c0_i32_2 = arith.constant 0 : i32
    return %arg0, %4, %c0_i32_0, %c0_i32_1 : i32, i32, i32, i32
  }
}

module attributes {stable_mosaic.version = 11 : i64} {
  func.func @_proj_bi_kernel(%arg0: i32, %arg1: memref<2x8x2x32xf32, #tpu.memory_space<vmem>>, %arg2: memref<32x16xf32, #tpu.memory_space<vmem>>, %arg3: memref<32x16xf32, #tpu.memory_space<vmem>>, %arg4: memref<1x16xf32, #tpu.memory_space<vmem>>, %arg5: memref<8x2x16xf32, #tpu.memory_space<vmem>>) attributes {dimension_semantics = [#tpu.dimension_semantics<parallel>], iteration_bounds = array<i64: 1>, scalar_prefetch = 0 : i64, scratch_operands = 0 : i64, tpu.core_type = #tpu.core_type<tc>, window_params = [{transform_indices = @transform_0, window_bounds = array<i64: 2, 8, 2, 32>}, {pipeline_mode = #tpu.pipeline_mode<synchronous>, transform_indices = @transform_1, window_bounds = array<i64: 32, 16>}, {pipeline_mode = #tpu.pipeline_mode<synchronous>, transform_indices = @transform_2, window_bounds = array<i64: 32, 16>}, {pipeline_mode = #tpu.pipeline_mode<synchronous>, transform_indices = @transform_3, window_bounds = array<i64: 1, 16>}, {transform_indices = @transform_4, window_bounds = array<i64: 8, 2, 16>}]} {
    %c0 = arith.constant 0 : index
    %c0_0 = arith.constant 0 : index
    %c0_1 = arith.constant 0 : index
    %c0_2 = arith.constant 0 : index
    %0 = vector.load %arg1[%c0, %c0_0, %c0_1, %c0_2] : memref<2x8x2x32xf32, #tpu.memory_space<vmem>>, vector<1x8x2x32xf32>
    %1 = vector.shape_cast %0 : vector<1x8x2x32xf32> to vector<8x2x32xf32>
    %2 = vector.shape_cast %1 : vector<8x2x32xf32> to vector<16x32xf32>
    %c1 = arith.constant 1 : index
    %c0_3 = arith.constant 0 : index
    %c0_4 = arith.constant 0 : index
    %c0_5 = arith.constant 0 : index
    %3 = vector.load %arg1[%c1, %c0_3, %c0_4, %c0_5] : memref<2x8x2x32xf32, #tpu.memory_space<vmem>>, vector<1x8x2x32xf32>
    %4 = vector.shape_cast %3 : vector<1x8x2x32xf32> to vector<8x2x32xf32>
    %5 = vector.shape_cast %4 : vector<8x2x32xf32> to vector<16x32xf32>
    %c0_6 = arith.constant 0 : index
    %c0_7 = arith.constant 0 : index
    %6 = vector.load %arg2[%c0_6, %c0_7] : memref<32x16xf32, #tpu.memory_space<vmem>>, vector<32x16xf32>
    %cst = arith.constant dense<0.000000e+00> : vector<16x16xf32>
    %7 = tpu.matmul %2, %6, %cst {dimension_numbers = #tpu.dot_dimension_numbers<[1], [0], [0], [1], [0, 0, 1, 1], [], []>} : vector<16x32xf32>, vector<32x16xf32>, vector<16x16xf32> -> vector<16x16xf32>
    %c0_8 = arith.constant 0 : index
    %c0_9 = arith.constant 0 : index
    %8 = vector.load %arg3[%c0_8, %c0_9] : memref<32x16xf32, #tpu.memory_space<vmem>>, vector<32x16xf32>
    %cst_10 = arith.constant dense<0.000000e+00> : vector<16x16xf32>
    %9 = tpu.matmul %5, %8, %cst_10 {dimension_numbers = #tpu.dot_dimension_numbers<[1], [0], [0], [1], [0, 0, 1, 1], [], []>} : vector<16x32xf32>, vector<32x16xf32>, vector<16x16xf32> -> vector<16x16xf32>
    %10 = arith.addf %7, %9 : vector<16x16xf32>
    %c0_11 = arith.constant 0 : index
    %c0_12 = arith.constant 0 : index
    %11 = vector.load %arg4[%c0_11, %c0_12] : memref<1x16xf32, #tpu.memory_space<vmem>>, vector<1x16xf32>
    %12 = vector.broadcast %11 : vector<1x16xf32> to vector<16x16xf32>
    %13 = arith.addf %10, %12 : vector<16x16xf32>
    %14 = vector.shape_cast %13 : vector<16x16xf32> to vector<8x2x16xf32>
    %c0_13 = arith.constant 0 : index
    %c0_14 = arith.constant 0 : index
    %c0_15 = arith.constant 0 : index
    %15 = vector.load %arg5[%c0_13, %c0_14, %c0_15] : memref<8x2x16xf32, #tpu.memory_space<vmem>>, vector<8x2x16xf32>
    tpu.vector_store %arg5[%c0_13, %c0_14, %c0_15], %14 {strides = array<i32>} : memref<8x2x16xf32, #tpu.memory_space<vmem>>, vector<8x2x16xf32>,
    return
  }
  func.func @transform_0(%arg0: i32) -> (i32, i32, i32, i32) {
    %c0_i32 = arith.constant 0 : i32
    %c0_i32_0 = arith.constant 0 : i32
    %c0_i32_1 = arith.constant 0 : i32
    %c0_i32_2 = arith.constant 0 : i32
    return %c0_i32, %arg0, %c0_i32_0, %c0_i32_1 : i32, i32, i32, i32
  }
  func.func @transform_1(%arg0: i32) -> (i32, i32) {
    %c0_i32 = arith.constant 0 : i32
    %c0_i32_0 = arith.constant 0 : i32
    %c0_i32_1 = arith.constant 0 : i32
    return %c0_i32, %c0_i32_0 : i32, i32
  }
  func.func @transform_2(%arg0: i32) -> (i32, i32) {
    %c0_i32 = arith.constant 0 : i32
    %c0_i32_0 = arith.constant 0 : i32
    %c0_i32_1 = arith.constant 0 : i32
    return %c0_i32, %c0_i32_0 : i32, i32
  }
  func.func @transform_3(%arg0: i32) -> (i32, i32) {
    %c0_i32 = arith.constant 0 : i32
    %c0_i32_0 = arith.constant 0 : i32
    %c0_i32_1 = arith.constant 0 : i32
    return %c0_i32, %c0_i32_0 : i32, i32
  }
  func.func @transform_4(%arg0: i32) -> (i32, i32, i32) {
    %c0_i32 = arith.constant 0 : i32
    %c0_i32_0 = arith.constant 0 : i32
    %c0_i32_1 = arith.constant 0 : i32
    return %arg0, %c0_i32, %c0_i32_0 : i32, i32, i32
  }
}

</mosaic_0001>

<llo_original>
// kernel: bidirectional_lstm_forward.5
$region0: #{bidirectional_lstm_forward.5}
  #allocation0 [shape = 'u32[]', space=smem, size = 0x4, offset = 0x4, fixed_abs, tag = 'smem constant byte address 0x4 - core index']
  #allocation1 [shape = 'u32[72,128]{1,0:T(1,128)}', space=vmem, size = 0x9000, scoped, tag = 'internal scratch']
  %s0 = inlined_call_operand.vmem [shape: f32[8,2,16], index: 0, kind: input, shape index: {}]
  %s1 = inlined_call_operand.vmem [shape: f32[16,256], index: 1, kind: input, shape index: {}]
  %s2 = inlined_call_operand.vmem [shape: f32[1,256], index: 2, kind: input, shape index: {}]
  %s3 = inlined_call_operand.vmem [shape: f32[8,2,256], index: 3, kind: output, shape index: {}]
  %s4 = sld [smem:[#allocation0]]
  $region22: #{bidirectional_lstm_forward.5} parent=0
    _
  %s6 = ssub.s32 1, %s4
  %s7 = scalar_select 0, %s6, %s4
  // Predicated region
  $region2: #{bidirectional_lstm_forward.5} parent=0 // pred_check
    _
  $region3: #{bidirectional_lstm_forward.5} parent=0 // pred_check_branch
    %9 = sbr.rel (0) target = $region5
  $region4: #{bidirectional_lstm_forward.5} parent=0 // pred_region
    _
  $region5: #{bidirectional_lstm_forward.5} parent=0 // pred_fallthru
    _
  // Predicated region
  $region6: #{bidirectional_lstm_forward.5} parent=0 // pred_check
    _
  $region7: #{bidirectional_lstm_forward.5} parent=0 // pred_check_branch
    %11 = sbr.rel (0) target = $region9
  $region8: #{bidirectional_lstm_forward.5} parent=0 // pred_region
    _
  $region9: #{bidirectional_lstm_forward.5} parent=0 // pred_fallthru
    _
  // Predicated region
  $region10: #{bidirectional_lstm_forward.5} parent=0 // pred_check
    _
  $region11: #{bidirectional_lstm_forward.5} parent=0 // pred_check_branch
    %13 = sbr.rel (0) target = $region13
  $region12: #{bidirectional_lstm_forward.5} parent=0 // pred_region
    _
  $region13: #{bidirectional_lstm_forward.5} parent=0 // pred_fallthru
    _
  %v14 = vld [vmem:[%s0] sm:$0x3]
  %v15 = vld [vmem:[%s0 + $0x2] sm:$0x3]
  %v16 = vld [vmem:[%s0 + $0x4] sm:$0x3]
  %v17 = vld [vmem:[%s0 + $0x6] sm:$0x3]
  %v18 = vld [vmem:[%s0 + $0x8] sm:$0x3]
  %v19 = vld [vmem:[%s0 + $0xa] sm:$0x3]
  %v20 = vld [vmem:[%s0 + $0xc] sm:$0x3]
  %v21 = vld [vmem:[%s0 + $0xe] sm:$0x3]
  %v22 = vld [vmem:[%s1] sm:$0xff]
  %v23 = vld [vmem:[%s1 + $0x8] sm:$0xff]
  %v24 = vld [vmem:[%s1 + $0x10] sm:$0xff]
  %v25 = vld [vmem:[%s1 + $0x18] sm:$0xff]
  %v26 = vld [vmem:[%s2] sm:$0x3]
  %v28 = vperm.slane %v26, 0
  %v29 = vperm.slane %v26, 1
  %40 = vst [vmem:[#allocation1] ss:$4 sm:$0xff] %v14
  %s41 = scalar_lea.vmem [#allocation1], 1
  %42 = vst [vmem:[%s41] ss:$4 sm:$0xff] %v15
  %s43 = scalar_lea.vmem [#allocation1], 2
  %44 = vst [vmem:[%s43] ss:$4 sm:$0xff] %v16
  %s45 = scalar_lea.vmem [#allocation1], 3
  %46 = vst [vmem:[%s45] ss:$4 sm:$0xff] %v17
  %s47 = scalar_lea.vmem [#allocation1], 32
  %48 = vst [vmem:[%s47] ss:$4 sm:$0xff] %v18
  %s49 = scalar_lea.vmem [#allocation1], 33
  %50 = vst [vmem:[%s49] ss:$4 sm:$0xff] %v19
  %s51 = scalar_lea.vmem [#allocation1], 34
  %52 = vst [vmem:[%s51] ss:$4 sm:$0xff] %v20
  %s53 = scalar_lea.vmem [#allocation1], 35
  %54 = vst [vmem:[%s53] ss:$4 sm:$0xff] %v21
  %v55 = vld.sshfl [vmem:[#allocation1] sm:$0xff pattern:$0x73625140]
  %v56 = vld.sshfl [vmem:[#allocation1 + $0x20] sm:$0xff pattern:$0x73625140]
  %vm57 = vcmask 130048
  %v58 = vsel %vm57, %v55, 0
  %v60 = vsel %vm57, %v56, 0
  %62 = vmatpush.msra.mxu0 0.0
  %63 = vmatpush.msra.mxu0 0.0
  %64 = vmatpush.msra.mxu0 0.0
  %65 = vmatpush.msra.mxu0 0.0
  %66 = vmatpush.msra.mxu0 0.0
  %67 = vmatpush.msra.mxu0 0.0
  %68 = vmatpush.msra.mxu0 0.0
  %69 = vmatpush.msra.mxu0 0.0
  %70 = vmatpush.msra.mxu0 0.0
  %71 = vmatpush.msra.mxu0 0.0
  %72 = vmatpush.msra.mxu0 0.0
  %73 = vmatpush.msra.mxu0 0.0
  %74 = vmatpush.msra.mxu0 0.0
  %75 = vmatpush.msra.mxu0 0.0
  %76 = vmatpush.msra.mxu0 %v24
  %77 = vmatpush.msra.mxu0 %v22
  %78 = vmatmul.f32.gmra.mxu0 %v58
  %v79 = vpop.f32.mrf.mxu0
  %v80 = vadd.f32 %v28, %v79
  %81 = vmatmul.f32.gmra.mxu0 %v60
  %v82 = vpop.f32.mrf.mxu0
  %v83 = vadd.f32 %v28, %v82
  %84 = vdwg.mxu0
  %85 = vmatpush.msra.mxu0 0.0
  %86 = vmatpush.msra.mxu0 0.0
  %87 = vmatpush.msra.mxu0 0.0
  %88 = vmatpush.msra.mxu0 0.0
  %89 = vmatpush.msra.mxu0 0.0
  %90 = vmatpush.msra.mxu0 0.0
  %91 = vmatpush.msra.mxu0 0.0
  %92 = vmatpush.msra.mxu0 0.0
  %93 = vmatpush.msra.mxu0 0.0
  %94 = vmatpush.msra.mxu0 0.0
  %95 = vmatpush.msra.mxu0 0.0
  %96 = vmatpush.msra.mxu0 0.0
  %97 = vmatpush.msra.mxu0 0.0
  %98 = vmatpush.msra.mxu0 0.0
  %99 = vmatpush.msra.mxu0 %v25
  %100 = vmatpush.msra.mxu0 %v23
  %101 = vmatmul.f32.gmra.mxu0 %v58
  %v102 = vpop.f32.mrf.mxu0
  %v103 = vadd.f32 %v29, %v102
  %104 = vmatmul.f32.gmra.mxu0 %v60
  %v105 = vpop.f32.mrf.mxu0
  %v106 = vadd.f32 %v29, %v105
  %107 = vdwg.mxu0
  %v112 = vrot.slane %v103, 6
  %v113 = vrot.slane %v106, 6
  %vm114 = vcmask 1041408
  %v115 = vsel %vm114, %v80, %v112
  %vm116 = vcmask 1043458
  %v117 = vsel %vm116, %v80, %v112
  %v118 = vrot.slane %v117, 2
  %vm119 = vcmask 1045508
  %v120 = vsel %vm119, %v80, %v112
  %v121 = vrot.slane %v120, 4
  %vm122 = vcmask 1045504
  %v123 = vsel %vm122, %v112, %v80
  %v124 = vrot.slane %v123, 6
  %v125 = vsel %vm114, %v83, %v113
  %v126 = vsel %vm116, %v83, %v113
  %v127 = vrot.slane %v126, 2
  %v128 = vsel %vm119, %v83, %v113
  %v129 = vrot.slane %v128, 4
  %v130 = vsel %vm122, %v113, %v83
  %v131 = vrot.slane %v130, 6
  %140 = vst [vmem:[%s3] sm:$0xf] %v115
  %141 = vst [vmem:[%s3 + $0x4] sm:$0xf] %v118
  %142 = vst [vmem:[%s3 + $0x8] sm:$0xf] %v121
  %143 = vst [vmem:[%s3 + $0xc] sm:$0xf] %v124
  %144 = vst [vmem:[%s3 + $0x10] sm:$0xf] %v125
  %145 = vst [vmem:[%s3 + $0x14] sm:$0xf] %v127
  %146 = vst [vmem:[%s3 + $0x18] sm:$0xf] %v129
  %147 = vst [vmem:[%s3 + $0x1c] sm:$0xf] %v131
  // Predicated region
  $region14: #{bidirectional_lstm_forward.5} parent=0 // pred_check
    _
  $region15: #{bidirectional_lstm_forward.5} parent=0 // pred_check_branch
    %149 = sbr.rel (0) target = $region17
  $region16: #{bidirectional_lstm_forward.5} parent=0 // pred_region
    _
  $region17: #{bidirectional_lstm_forward.5} parent=0 // pred_fallthru
    _
  // Predicated region
  $region18: #{bidirectional_lstm_forward.5} parent=0 // pred_check
    _
  $region19: #{bidirectional_lstm_forward.5} parent=0 // pred_check_branch
    %151 = sbr.rel (0) target = $region21
  $region20: #{bidirectional_lstm_forward.5} parent=0 // pred_region
    _
  $region21: #{bidirectional_lstm_forward.5} parent=0 // pred_fallthru
    _

// kernel: bidirectional_lstm_forward.7
$region0: #{bidirectional_lstm_forward.7}
  #allocation0 [shape = 'u32[]', space=smem, size = 0x4, offset = 0x4, fixed_abs, tag = 'smem constant byte address 0x4 - core index']
  #allocation1 [shape = 'u32[72,128]{1,0:T(1,128)}', space=vmem, size = 0x9000, scoped, tag = 'internal scratch']
  %s0 = inlined_call_operand.vmem [shape: f32[2,8,2,32], index: 0, kind: input, shape index: {}]
  %s1 = inlined_call_operand.vmem [shape: f32[32,256], index: 1, kind: input, shape index: {}]
  %s2 = inlined_call_operand.vmem [shape: f32[32,256], index: 2, kind: input, shape index: {}]
  %s3 = inlined_call_operand.vmem [shape: f32[1,256], index: 3, kind: input, shape index: {}]
  %s4 = inlined_call_operand.vmem [shape: f32[8,2,256], index: 4, kind: output, shape index: {}]
  %s5 = sld [smem:[#allocation0]]
  $region26: #{bidirectional_lstm_forward.7} parent=0
    _
  %s7 = ssub.s32 1, %s5
  %s8 = scalar_select 0, %s7, %s5
  // Predicated region
  $region2: #{bidirectional_lstm_forward.7} parent=0 // pred_check
    _
  $region3: #{bidirectional_lstm_forward.7} parent=0 // pred_check_branch
    %10 = sbr.rel (0) target = $region5
  $region4: #{bidirectional_lstm_forward.7} parent=0 // pred_region
    _
  $region5: #{bidirectional_lstm_forward.7} parent=0 // pred_fallthru
    _
  // Predicated region
  $region6: #{bidirectional_lstm_forward.7} parent=0 // pred_check
    _
  $region7: #{bidirectional_lstm_forward.7} parent=0 // pred_check_branch
    %12 = sbr.rel (0) target = $region9
  $region8: #{bidirectional_lstm_forward.7} parent=0 // pred_region
    _
  $region9: #{bidirectional_lstm_forward.7} parent=0 // pred_fallthru
    _
  // Predicated region
  $region10: #{bidirectional_lstm_forward.7} parent=0 // pred_check
    _
  $region11: #{bidirectional_lstm_forward.7} parent=0 // pred_check_branch
    %14 = sbr.rel (0) target = $region13
  $region12: #{bidirectional_lstm_forward.7} parent=0 // pred_region
    _
  $region13: #{bidirectional_lstm_forward.7} parent=0 // pred_fallthru
    _
  // Predicated region
  $region14: #{bidirectional_lstm_forward.7} parent=0 // pred_check
    _
  $region15: #{bidirectional_lstm_forward.7} parent=0 // pred_check_branch
    %16 = sbr.rel (0) target = $region17
  $region16: #{bidirectional_lstm_forward.7} parent=0 // pred_region
    _
  $region17: #{bidirectional_lstm_forward.7} parent=0 // pred_fallthru
    _
  %v17 = vld [vmem:[%s0] sm:$0x3]
  %v18 = vld [vmem:[%s0 + $0x2] sm:$0x3]
  %v19 = vld [vmem:[%s0 + $0x4] sm:$0x3]
  %v20 = vld [vmem:[%s0 + $0x6] sm:$0x3]
  %v21 = vld [vmem:[%s0 + $0x8] sm:$0x3]
  %v22 = vld [vmem:[%s0 + $0xa] sm:$0x3]
  %v23 = vld [vmem:[%s0 + $0xc] sm:$0x3]
  %v24 = vld [vmem:[%s0 + $0xe] sm:$0x3]
  %s25 = scalar_lea.vmem %s0, 16
  %v26 = vld [vmem:[%s25] sm:$0x3]
  %v27 = vld [vmem:[%s25 + $0x2] sm:$0x3]
  %v28 = vld [vmem:[%s25 + $0x4] sm:$0x3]
  %v29 = vld [vmem:[%s25 + $0x6] sm:$0x3]
  %v30 = vld [vmem:[%s25 + $0x8] sm:$0x3]
  %v31 = vld [vmem:[%s25 + $0xa] sm:$0x3]
  %v32 = vld [vmem:[%s25 + $0xc] sm:$0x3]
  %v33 = vld [vmem:[%s25 + $0xe] sm:$0x3]
  %v34 = vld [vmem:[%s1] sm:$0xff]
  %v35 = vld [vmem:[%s1 + $0x8] sm:$0xff]
  %v36 = vld [vmem:[%s1 + $0x10] sm:$0xff]
  %v37 = vld [vmem:[%s1 + $0x18] sm:$0xff]
  %v38 = vld [vmem:[%s1 + $0x20] sm:$0xff]
  %v39 = vld [vmem:[%s1 + $0x28] sm:$0xff]
  %v40 = vld [vmem:[%s1 + $0x30] sm:$0xff]
  %v41 = vld [vmem:[%s1 + $0x38] sm:$0xff]
  %v42 = vld [vmem:[%s2] sm:$0xff]
  %v43 = vld [vmem:[%s2 + $0x8] sm:$0xff]
  %v44 = vld [vmem:[%s2 + $0x10] sm:$0xff]
  %v45 = vld [vmem:[%s2 + $0x18] sm:$0xff]
  %v46 = vld [vmem:[%s2 + $0x20] sm:$0xff]
  %v47 = vld [vmem:[%s2 + $0x28] sm:$0xff]
  %v48 = vld [vmem:[%s2 + $0x30] sm:$0xff]
  %v49 = vld [vmem:[%s2 + $0x38] sm:$0xff]
  %58 = vst [vmem:[#allocation1] ss:$4 sm:$0xff] %v26
  %s59 = scalar_lea.vmem [#allocation1], 1
  %60 = vst [vmem:[%s59] ss:$4 sm:$0xff] %v27
  %s61 = scalar_lea.vmem [#allocation1], 2
  %62 = vst [vmem:[%s61] ss:$4 sm:$0xff] %v28
  %s63 = scalar_lea.vmem [#allocation1], 3
  %64 = vst [vmem:[%s63] ss:$4 sm:$0xff] %v29
  %s65 = scalar_lea.vmem [#allocation1], 32
  %66 = vst [vmem:[%s65] ss:$4 sm:$0xff] %v30
  %s67 = scalar_lea.vmem [#allocation1], 33
  %68 = vst [vmem:[%s67] ss:$4 sm:$0xff] %v31
  %s69 = scalar_lea.vmem [#allocation1], 34
  %70 = vst [vmem:[%s69] ss:$4 sm:$0xff] %v32
  %s71 = scalar_lea.vmem [#allocation1], 35
  %72 = vst [vmem:[%s71] ss:$4 sm:$0xff] %v33
  %v73 = vld.sshfl [vmem:[#allocation1] sm:$0xff pattern:$0x73625140]
  %v74 = vld.sshfl [vmem:[#allocation1 + $0x20] sm:$0xff pattern:$0x73625140]
  %vm75 = vcmask 261120
  %v76 = vsel %vm75, %v73, 0
  %v78 = vsel %vm75, %v74, 0
  %80 = vmatpush.msra.mxu0 0.0
  %81 = vmatpush.msra.mxu0 0.0
  %82 = vmatpush.msra.mxu0 0.0
  %83 = vmatpush.msra.mxu0 0.0
  %84 = vmatpush.msra.mxu0 0.0
  %85 = vmatpush.msra.mxu0 0.0
  %86 = vmatpush.msra.mxu0 0.0
  %87 = vmatpush.msra.mxu0 0.0
  %88 = vmatpush.msra.mxu0 0.0
  %89 = vmatpush.msra.mxu0 0.0
  %90 = vmatpush.msra.mxu0 0.0
  %91 = vmatpush.msra.mxu0 0.0
  %92 = vmatpush.msra.mxu0 %v48
  %93 = vmatpush.msra.mxu0 %v46
  %94 = vmatpush.msra.mxu0 %v44
  %95 = vmatpush.msra.mxu0 %v42
  %96 = vmatmul.f32.gmra.mxu0 %v76
  %v97 = vpop.f32.mrf.mxu0
  %v98 = vadd.f32 0.0, %v97
  %99 = vmatmul.f32.gmra.mxu0 %v78
  %v100 = vpop.f32.mrf.mxu0
  %v101 = vadd.f32 0.0, %v100
  %102 = vdwg.mxu0
  %103 = vmatpush.msra.mxu0 0.0
  %104 = vmatpush.msra.mxu0 0.0
  %105 = vmatpush.msra.mxu0 0.0
  %106 = vmatpush.msra.mxu0 0.0
  %107 = vmatpush.msra.mxu0 0.0
  %108 = vmatpush.msra.mxu0 0.0
  %109 = vmatpush.msra.mxu0 0.0
  %110 = vmatpush.msra.mxu0 0.0
  %111 = vmatpush.msra.mxu0 0.0
  %112 = vmatpush.msra.mxu0 0.0
  %113 = vmatpush.msra.mxu0 0.0
  %114 = vmatpush.msra.mxu0 0.0
  %115 = vmatpush.msra.mxu0 %v49
  %116 = vmatpush.msra.mxu0 %v47
  %117 = vmatpush.msra.mxu0 %v45
  %118 = vmatpush.msra.mxu0 %v43
  %119 = vmatmul.f32.gmra.mxu0 %v76
  %v120 = vpop.f32.mrf.mxu0
  %v121 = vadd.f32 0.0, %v120
  %122 = vmatmul.f32.gmra.mxu0 %v78
  %v123 = vpop.f32.mrf.mxu0
  %v124 = vadd.f32 0.0, %v123
  %125 = vdwg.mxu0
  %134 = vst [vmem:[#allocation1] ss:$4 sm:$0xff] %v17
  %s135 = scalar_lea.vmem [#allocation1], 1
  %136 = vst [vmem:[%s135] ss:$4 sm:$0xff] %v18
  %s137 = scalar_lea.vmem [#allocation1], 2
  %138 = vst [vmem:[%s137] ss:$4 sm:$0xff] %v19
  %s139 = scalar_lea.vmem [#allocation1], 3
  %140 = vst [vmem:[%s139] ss:$4 sm:$0xff] %v20
  %s141 = scalar_lea.vmem [#allocation1], 32
  %142 = vst [vmem:[%s141] ss:$4 sm:$0xff] %v21
  %s143 = scalar_lea.vmem [#allocation1], 33
  %144 = vst [vmem:[%s143] ss:$4 sm:$0xff] %v22
  %s145 = scalar_lea.vmem [#allocation1], 34
  %146 = vst [vmem:[%s145] ss:$4 sm:$0xff] %v23
  %s147 = scalar_lea.vmem [#allocation1], 35
  %148 = vst [vmem:[%s147] ss:$4 sm:$0xff] %v24
  %v149 = vld.sshfl [vmem:[#allocation1] sm:$0xff pattern:$0x73625140]
  %v150 = vld.sshfl [vmem:[#allocation1 + $0x20] sm:$0xff pattern:$0x73625140]
  %v151 = vsel %vm75, %v149, 0
  %v153 = vsel %vm75, %v150, 0
  %155 = vmatpush.msra.mxu0 0.0
  %156 = vmatpush.msra.mxu0 0.0
  %157 = vmatpush.msra.mxu0 0.0
  %158 = vmatpush.msra.mxu0 0.0
  %159 = vmatpush.msra.mxu0 0.0
  %160 = vmatpush.msra.mxu0 0.0
  %161 = vmatpush.msra.mxu0 0.0
  %162 = vmatpush.msra.mxu0 0.0
  %163 = vmatpush.msra.mxu0 0.0
  %164 = vmatpush.msra.mxu0 0.0
  %165 = vmatpush.msra.mxu0 0.0
  %166 = vmatpush.msra.mxu0 0.0
  %167 = vmatpush.msra.mxu0 %v40
  %168 = vmatpush.msra.mxu0 %v38
  %169 = vmatpush.msra.mxu0 %v36
  %170 = vmatpush.msra.mxu0 %v34
  %171 = vmatmul.f32.gmra.mxu0 %v151
  %v172 = vpop.f32.mrf.mxu0
  %v173 = vadd.f32 %v98, %v172
  %174 = vmatmul.f32.gmra.mxu0 %v153
  %v175 = vpop.f32.mrf.mxu0
  %v176 = vadd.f32 %v101, %v175
  %177 = vdwg.mxu0
  %178 = vmatpush.msra.mxu0 0.0
  %179 = vmatpush.msra.mxu0 0.0
  %180 = vmatpush.msra.mxu0 0.0
  %181 = vmatpush.msra.mxu0 0.0
  %182 = vmatpush.msra.mxu0 0.0
  %183 = vmatpush.msra.mxu0 0.0
  %184 = vmatpush.msra.mxu0 0.0
  %185 = vmatpush.msra.mxu0 0.0
  %186 = vmatpush.msra.mxu0 0.0
  %187 = vmatpush.msra.mxu0 0.0
  %188 = vmatpush.msra.mxu0 0.0
  %189 = vmatpush.msra.mxu0 0.0
  %190 = vmatpush.msra.mxu0 %v41
  %191 = vmatpush.msra.mxu0 %v39
  %192 = vmatpush.msra.mxu0 %v37
  %193 = vmatpush.msra.mxu0 %v35
  %194 = vmatmul.f32.gmra.mxu0 %v151
  %v195 = vpop.f32.mrf.mxu0
  %v196 = vadd.f32 %v121, %v195
  %197 = vmatmul.f32.gmra.mxu0 %v153
  %v198 = vpop.f32.mrf.mxu0
  %v199 = vadd.f32 %v124, %v198
  %200 = vdwg.mxu0
  %v201 = vld [vmem:[%s3] sm:$0x3]
  %v203 = vperm.slane %v201, 0
  %v204 = vperm.slane %v201, 1
  %v207 = vadd.f32 %v173, %v203
  %v208 = vadd.f32 %v196, %v204
  %v209 = vadd.f32 %v176, %v203
  %v210 = vadd.f32 %v199, %v204
  %v215 = vrot.slane %v208, 6
  %v216 = vrot.slane %v210, 6
  %vm217 = vcmask 1041408
  %v218 = vsel %vm217, %v207, %v215
  %vm219 = vcmask 1043458
  %v220 = vsel %vm219, %v207, %v215
  %v221 = vrot.slane %v220, 2
  %vm222 = vcmask 1045508
  %v223 = vsel %vm222, %v207, %v215
  %v224 = vrot.slane %v223, 4
  %vm225 = vcmask 1045504
  %v226 = vsel %vm225, %v215, %v207
  %v227 = vrot.slane %v226, 6
  %v228 = vsel %vm217, %v209, %v216
  %v229 = vsel %vm219, %v209, %v216
  %v230 = vrot.slane %v229, 2
  %v231 = vsel %vm222, %v209, %v216
  %v232 = vrot.slane %v231, 4
  %v233 = vsel %vm225, %v216, %v209
  %v234 = vrot.slane %v233, 6
  %243 = vst [vmem:[%s4] sm:$0xf] %v218
  %244 = vst [vmem:[%s4 + $0x4] sm:$0xf] %v221
  %245 = vst [vmem:[%s4 + $0x8] sm:$0xf] %v224
  %246 = vst [vmem:[%s4 + $0xc] sm:$0xf] %v227
  %247 = vst [vmem:[%s4 + $0x10] sm:$0xf] %v228
  %248 = vst [vmem:[%s4 + $0x14] sm:$0xf] %v230
  %249 = vst [vmem:[%s4 + $0x18] sm:$0xf] %v232
  %250 = vst [vmem:[%s4 + $0x1c] sm:$0xf] %v234
  // Predicated region
  $region18: #{bidirectional_lstm_forward.7} parent=0 // pred_check
    _
  $region19: #{bidirectional_lstm_forward.7} parent=0 // pred_check_branch
    %252 = sbr.rel (0) target = $region21
  $region20: #{bidirectional_lstm_forward.7} parent=0 // pred_region
    _
  $region21: #{bidirectional_lstm_forward.7} parent=0 // pred_fallthru
    _
  // Predicated region
  $region22: #{bidirectional_lstm_forward.7} parent=0 // pred_check
    _
  $region23: #{bidirectional_lstm_forward.7} parent=0 // pred_check_branch
    %254 = sbr.rel (0) target = $region25
  $region24: #{bidirectional_lstm_forward.7} parent=0 // pred_region
    _
  $region25: #{bidirectional_lstm_forward.7} parent=0 // pred_fallthru
    _

// kernel: bidirectional_lstm_forward.9
$region0: #{bidirectional_lstm_forward.9}
  #allocation0 [shape = 'u32[]', space=smem, size = 0x4, offset = 0x4, fixed_abs, tag = 'smem constant byte address 0x4 - core index']
  #allocation1 [shape = 'u32[72,128]{1,0:T(1,128)}', space=vmem, size = 0x9000, scoped, tag = 'internal scratch']
  %s0 = inlined_call_operand.vmem [shape: f32[2,8,2,32], index: 0, kind: input, shape index: {}]
  %s1 = inlined_call_operand.vmem [shape: f32[32,16], index: 1, kind: input, shape index: {}]
  %s2 = inlined_call_operand.vmem [shape: f32[32,16], index: 2, kind: input, shape index: {}]
  %s3 = inlined_call_operand.vmem [shape: f32[1,16], index: 3, kind: input, shape index: {}]
  %s4 = inlined_call_operand.hbm [shape: f32[8,2,16], index: 4, kind: output, shape index: {}]
  %s5 = sld [smem:[#allocation0]]
  $region26: #{bidirectional_lstm_forward.9} parent=0
    _
  %s7 = ssub.s32 1, %s5
  %s8 = scalar_select 0, %s7, %s5
  $region1: #{bidirectional_lstm_forward.9} parent=0
    #allocation2 [shape = 'u8[8192]{0}', space=vmem, size = 0x2000, scoped, tag = 'output window, operand 0, single buffered']
    #allocation3 [shape = 's32[1]{0}', space=sflag, size = 0x4, scoped, tag = 'scoped memory for bidirectional_lstm_forward.9']
    %9 = vsyncpa [#allocation3], 0
    // Predicated region
    $region2: #{bidirectional_lstm_forward.9} parent=1 // pred_check
      _
    $region3: #{bidirectional_lstm_forward.9} parent=1 // pred_check_branch
      %11 = sbr.rel (0) target = $region5
    $region4: #{bidirectional_lstm_forward.9} parent=1 // pred_region
      _
    $region5: #{bidirectional_lstm_forward.9} parent=1 // pred_fallthru
      _
    // Predicated region
    $region6: #{bidirectional_lstm_forward.9} parent=1 // pred_check
      _
    $region7: #{bidirectional_lstm_forward.9} parent=1 // pred_check_branch
      %13 = sbr.rel (0) target = $region9
    $region8: #{bidirectional_lstm_forward.9} parent=1 // pred_region
      _
    $region9: #{bidirectional_lstm_forward.9} parent=1 // pred_fallthru
      _
    // Predicated region
    $region10: #{bidirectional_lstm_forward.9} parent=1 // pred_check
      _
    $region11: #{bidirectional_lstm_forward.9} parent=1 // pred_check_branch
      %15 = sbr.rel (0) target = $region13
    $region12: #{bidirectional_lstm_forward.9} parent=1 // pred_region
      _
    $region13: #{bidirectional_lstm_forward.9} parent=1 // pred_fallthru
      _
    // Predicated region
    $region14: #{bidirectional_lstm_forward.9} parent=1 // pred_check
      _
    $region15: #{bidirectional_lstm_forward.9} parent=1 // pred_check_branch
      %17 = sbr.rel (0) target = $region17
    $region16: #{bidirectional_lstm_forward.9} parent=1 // pred_region
      _
    $region17: #{bidirectional_lstm_forward.9} parent=1 // pred_fallthru
      _
    %v18 = vld [vmem:[%s0] sm:$0x3]
    %v19 = vld [vmem:[%s0 + $0x2] sm:$0x3]
    %v20 = vld [vmem:[%s0 + $0x4] sm:$0x3]
    %v21 = vld [vmem:[%s0 + $0x6] sm:$0x3]
    %v22 = vld [vmem:[%s0 + $0x8] sm:$0x3]
    %v23 = vld [vmem:[%s0 + $0xa] sm:$0x3]
    %v24 = vld [vmem:[%s0 + $0xc] sm:$0x3]
    %v25 = vld [vmem:[%s0 + $0xe] sm:$0x3]
    %s26 = scalar_lea.vmem %s0, 16
    %v27 = vld [vmem:[%s26] sm:$0x3]
    %v28 = vld [vmem:[%s26 + $0x2] sm:$0x3]
    %v29 = vld [vmem:[%s26 + $0x4] sm:$0x3]
    %v30 = vld [vmem:[%s26 + $0x6] sm:$0x3]
    %v31 = vld [vmem:[%s26 + $0x8] sm:$0x3]
    %v32 = vld [vmem:[%s26 + $0xa] sm:$0x3]
    %v33 = vld [vmem:[%s26 + $0xc] sm:$0x3]
    %v34 = vld [vmem:[%s26 + $0xe] sm:$0x3]
    %v35 = vld [vmem:[%s1] sm:$0xff]
    %v36 = vld [vmem:[%s1 + $0x8] sm:$0xff]
    %v37 = vld [vmem:[%s1 + $0x10] sm:$0xff]
    %v38 = vld [vmem:[%s1 + $0x18] sm:$0xff]
    %v39 = vld [vmem:[%s2] sm:$0xff]
    %v40 = vld [vmem:[%s2 + $0x8] sm:$0xff]
    %v41 = vld [vmem:[%s2 + $0x10] sm:$0xff]
    %v42 = vld [vmem:[%s2 + $0x18] sm:$0xff]
    %51 = vst [vmem:[#allocation1] ss:$4 sm:$0xff] %v27
    %s52 = scalar_lea.vmem [#allocation1], 1
    %53 = vst [vmem:[%s52] ss:$4 sm:$0xff] %v28
    %s54 = scalar_lea.vmem [#allocation1], 2
    %55 = vst [vmem:[%s54] ss:$4 sm:$0xff] %v29
    %s56 = scalar_lea.vmem [#allocation1], 3
    %57 = vst [vmem:[%s56] ss:$4 sm:$0xff] %v30
    %s58 = scalar_lea.vmem [#allocation1], 32
    %59 = vst [vmem:[%s58] ss:$4 sm:$0xff] %v31
    %s60 = scalar_lea.vmem [#allocation1], 33
    %61 = vst [vmem:[%s60] ss:$4 sm:$0xff] %v32
    %s62 = scalar_lea.vmem [#allocation1], 34
    %63 = vst [vmem:[%s62] ss:$4 sm:$0xff] %v33
    %s64 = scalar_lea.vmem [#allocation1], 35
    %65 = vst [vmem:[%s64] ss:$4 sm:$0xff] %v34
    %v66 = vld.sshfl [vmem:[#allocation1] sm:$0xff pattern:$0x73625140]
    %v67 = vld.sshfl [vmem:[#allocation1 + $0x20] sm:$0xff pattern:$0x73625140]
    %vm68 = vcmask 261120
    %v69 = vsel %vm68, %v66, 0
    %v71 = vsel %vm68, %v67, 0
    %73 = vmatpush.msra.mxu0 0.0
    %74 = vmatpush.msra.mxu0 0.0
    %75 = vmatpush.msra.mxu0 0.0
    %76 = vmatpush.msra.mxu0 0.0
    %77 = vmatpush.msra.mxu0 0.0
    %78 = vmatpush.msra.mxu0 0.0
    %79 = vmatpush.msra.mxu0 0.0
    %80 = vmatpush.msra.mxu0 0.0
    %81 = vmatpush.msra.mxu0 0.0
    %82 = vmatpush.msra.mxu0 0.0
    %83 = vmatpush.msra.mxu0 0.0
    %84 = vmatpush.msra.mxu0 0.0
    %85 = vmatpush.msra.mxu0 %v42
    %86 = vmatpush.msra.mxu0 %v41
    %87 = vmatpush.msra.mxu0 %v40
    %88 = vmatpush.msra.mxu0 %v39
    %89 = vmatmul.f32.gmra.mxu0 %v69
    %v90 = vpop.f32.mrf.mxu0
    %v91 = vadd.f32 0.0, %v90
    %92 = vmatmul.f32.gmra.mxu0 %v71
    %v93 = vpop.f32.mrf.mxu0
    %v94 = vadd.f32 0.0, %v93
    %95 = vdwg.mxu0
    %104 = vst [vmem:[#allocation1] ss:$4 sm:$0xff] %v18
    %s105 = scalar_lea.vmem [#allocation1], 1
    %106 = vst [vmem:[%s105] ss:$4 sm:$0xff] %v19
    %s107 = scalar_lea.vmem [#allocation1], 2
    %108 = vst [vmem:[%s107] ss:$4 sm:$0xff] %v20
    %s109 = scalar_lea.vmem [#allocation1], 3
    %110 = vst [vmem:[%s109] ss:$4 sm:$0xff] %v21
    %s111 = scalar_lea.vmem [#allocation1], 32
    %112 = vst [vmem:[%s111] ss:$4 sm:$0xff] %v22
    %s113 = scalar_lea.vmem [#allocation1], 33
    %114 = vst [vmem:[%s113] ss:$4 sm:$0xff] %v23
    %s115 = scalar_lea.vmem [#allocation1], 34
    %116 = vst [vmem:[%s115] ss:$4 sm:$0xff] %v24
    %s117 = scalar_lea.vmem [#allocation1], 35
    %118 = vst [vmem:[%s117] ss:$4 sm:$0xff] %v25
    %v119 = vld.sshfl [vmem:[#allocation1] sm:$0xff pattern:$0x73625140]
    %v120 = vld.sshfl [vmem:[#allocation1 + $0x20] sm:$0xff pattern:$0x73625140]
    %v121 = vsel %vm68, %v119, 0
    %v123 = vsel %vm68, %v120, 0
    %125 = vmatpush.msra.mxu0 0.0
    %126 = vmatpush.msra.mxu0 0.0
    %127 = vmatpush.msra.mxu0 0.0
    %128 = vmatpush.msra.mxu0 0.0
    %129 = vmatpush.msra.mxu0 0.0
    %130 = vmatpush.msra.mxu0 0.0
    %131 = vmatpush.msra.mxu0 0.0
    %132 = vmatpush.msra.mxu0 0.0
    %133 = vmatpush.msra.mxu0 0.0
    %134 = vmatpush.msra.mxu0 0.0
    %135 = vmatpush.msra.mxu0 0.0
    %136 = vmatpush.msra.mxu0 0.0
    %137 = vmatpush.msra.mxu0 %v38
    %138 = vmatpush.msra.mxu0 %v37
    %139 = vmatpush.msra.mxu0 %v36
    %140 = vmatpush.msra.mxu0 %v35
    %141 = vmatmul.f32.gmra.mxu0 %v121
    %v142 = vpop.f32.mrf.mxu0
    %v143 = vadd.f32 %v91, %v142
    %144 = vmatmul.f32.gmra.mxu0 %v123
    %v145 = vpop.f32.mrf.mxu0
    %v146 = vadd.f32 %v94, %v145
    %147 = vdwg.mxu0
    %v148 = vld [vmem:[%s3] sm:$0x1]
    %v150 = vperm.slane %v148, 0
    %v152 = vadd.f32 %v143, %v150
    %v153 = vadd.f32 %v146, %v150
    %v156 = vrot.slane %v152, 2
    %v157 = vrot.slane %v152, 4
    %v158 = vrot.slane %v152, 6
    %v159 = vrot.slane %v153, 2
    %v160 = vrot.slane %v153, 4
    %v161 = vrot.slane %v153, 6
    %vm168 = vcmask 123904
    %169 = vst.msk [vmem:[#allocation2] sm:$0x3] %vm168, %v152
    %170 = vst.msk [vmem:[#allocation2 + $0x2] sm:$0x3] %vm168, %v156
    %171 = vst.msk [vmem:[#allocation2 + $0x4] sm:$0x3] %vm168, %v157
    %172 = vst.msk [vmem:[#allocation2 + $0x6] sm:$0x3] %vm168, %v158
    %173 = vst.msk [vmem:[#allocation2 + $0x8] sm:$0x3] %vm168, %v153
    %174 = vst.msk [vmem:[#allocation2 + $0xa] sm:$0x3] %vm168, %v159
    %175 = vst.msk [vmem:[#allocation2 + $0xc] sm:$0x3] %vm168, %v160
    %176 = vst.msk [vmem:[#allocation2 + $0xe] sm:$0x3] %vm168, %v161
    // Predicated region
    $region18: #{bidirectional_lstm_forward.9} parent=1 // pred_check
      _
    $region19: #{bidirectional_lstm_forward.9} parent=1 // pred_check_branch
      %178 = sbr.rel (0) target = $region21
    $region20: #{bidirectional_lstm_forward.9} parent=1 // pred_region
      %180 = vsyncadd [#allocation3], 0
      %s181 = sshll.u32 [#allocation2], 4
      %s182 = int_to_ptr.vmem [resolvable:$true] %s181
      %s183 = sshll.u32 %s4, 4
      %s184 = int_to_ptr.hbm [resolvable:$true] %s183
      %189 = dma.vmem_to_hbm [thread:$0]  %s182, 256, %s184, [#allocation3], 32, 32, 2
    $region21: #{bidirectional_lstm_forward.9} parent=1 // pred_fallthru
      _
    // Predicated region
    $region22: #{bidirectional_lstm_forward.9} parent=1 // pred_check
      _
    $region23: #{bidirectional_lstm_forward.9} parent=1 // pred_check_branch
      %191 = sbr.rel (0) target = $region25
    $region24: #{bidirectional_lstm_forward.9} parent=1 // pred_region
      %193 = dma.done [#allocation3], 256
    $region25: #{bidirectional_lstm_forward.9} parent=1 // pred_fallthru
      _
    %194 = vsyncpa [#allocation3], 1

// kernel: bidirectional_lstm_forward.6
$region0: #{bidirectional_lstm_forward.6}
  #allocation0 [shape = 'u32[]', space=smem, size = 0x4, offset = 0x4, fixed_abs, tag = 'smem constant byte address 0x4 - core index']
  #allocation1 [shape = 'u32[72,128]{1,0:T(1,128)}', space=vmem, size = 0x9000, scoped, tag = 'internal scratch']
  #allocation2 [shape = 'f32[2,32]{1,0:T(2,128)}', space=vmem, size = 0x400, scoped, tag = 'scratch operand']
  #allocation3 [shape = 'f32[2,32]{1,0:T(2,128)}', space=vmem, size = 0x400, scoped, tag = 'scratch operand']
  %s0 = inlined_call_operand.vmem [shape: f32[8,2,256], index: 0, kind: input, shape index: {}]
  %s1 = inlined_call_operand.vmem [shape: f32[2,32,128], index: 1, kind: input, shape index: {}]
  %s2 = inlined_call_operand.vmem [shape: f32[2,8,2,32], index: 2, kind: output, shape index: {}]
  %s3 = sld [smem:[#allocation0]]
  $region86: #{bidirectional_lstm_forward.6} parent=0
    _
  %s5 = ssub.s32 1, %s3
  %s6 = scalar_select 0, %s5, %s3
  $region1: #{bidirectional_lstm_forward.6} parent=0
    #allocation4 [shape = 'u8[16384]{0}', space=vmem, size = 0x4000, scoped, tag = 'input window, operand 0']
    loop: start=0, step=1, limit=4
    $region2: #{bidirectional_lstm_forward.6} parent=1 // loop_pre_header
      _
    $region3: #{bidirectional_lstm_forward.6} parent=1 // loop_header
      %s8 = sphi 0, %s12
      %p9 = scmp.ge.s32.totalorder %s8, 4
      %s15 = sphi 0, %s27
      %s16 = sphi 0, %s23
      %s17 = sphi 0, %s15
      %s18 = sphi 0, %s16
      %s19 = sphi 0, %s17
      %s20 = sphi 0, %s18
      %s42 = sphi 0, %s44
      %s45 = sphi 0, %s42
      %s46 = sphi 0, %s45
      %s62 = sphi 0, %s46
      %s68 = sphi 0, %s70
      %s71 = sphi 0, %s68
      %s72 = sphi 0, %s71
      %s88 = sphi 0, %s72
      %s106 = sphi 0, %s108
      %s109 = sphi 0, %s106
      %s110 = sphi 0, %s109
      %s126 = sphi 0, %s110
    $region4: #{bidirectional_lstm_forward.6} parent=1 // loop_header_branch
      %11 = sbr.rel (%p9) target = $region8
    $region5: #{bidirectional_lstm_forward.6} parent=1 // loop_body
      %s13 = ssub.s32 %s8, 1
      %s14 = ssub.s32 %s8, 2
      %s21 = sadd.s32 1, %s16
      %p22 = scmp.ge.s32.totalorder %s21, 1
      %s23 = scalar_select %p22, 0, %s21
      %s24 = sadd.s32 1, %s15
      %s25 = scalar_select %p22, %s24, %s15
      %p26 = scmp.ge.s32.totalorder %s25, 2
      %s27 = scalar_select %p26, 0, %s25
      %s28 = ssub.s32 0, %s16
      %s29 = smul.u32 %s15, %s28
      %s30 = ssub.s32 1, %s15
      %s31 = smul.u32 %s30, %s16
      %s32 = sadd.s32 %s29, %s31
      %s33 = ssub.s32 0, %s23
      %s34 = smul.u32 %s27, %s33
      %s35 = ssub.s32 1, %s27
      %s36 = smul.u32 %s35, %s23
      %s37 = sadd.s32 %s34, %s36
      %s38 = ssub.s32 %s32, %s37
      %s39 = ssub.s32 %s15, %s27
      %s40 = sor.u32 %s38, %s39
      %p41 = scmp.eq.s32.totalorder %s40, 0
      %s43 = sadd.s32 %s42, 1
      %s44 = scalar_select %p41, %s42, %s43
      %p47 = pneg %p41
      %p48 = scmp.eq.s32.totalorder %s8, 1
      %p49 = por %p47, %p48
      %p50 = scmp.ne.s32.totalorder %s42, %s45
      %p51 = scmp.eq.s32.totalorder %s8, 0
      %p52 = por %p50, %p51
      %p53 = scmp.ne.s32.totalorder %s42, %s45
      %p54 = scmp.eq.s32.totalorder %s13, 1
      %p55 = por %p53, %p54
      %p56 = scmp.ne.s32.totalorder %s45, %s46
      %p57 = scmp.eq.s32.totalorder %s13, 0
      %p58 = por %p56, %p57
      %p59 = scmp.ne.s32.totalorder %s45, %s46
      %p60 = scmp.eq.s32.totalorder %s14, 1
      %p61 = por %p59, %p60
      %p63 = scmp.ne.s32.totalorder %s46, %s62
      %p64 = scmp.eq.s32.totalorder %s14, 0
      %p65 = por %p63, %p64
      %s66 = ssub.s32 %s15, %s27
      %p67 = scmp.eq.s32.totalorder %s66, 0
      %s69 = sadd.s32 %s68, 1
      %s70 = scalar_select %p67, %s68, %s69
      %p73 = pneg %p67
      %p74 = scmp.eq.s32.totalorder %s8, 1
      %p75 = por %p73, %p74
      %p76 = scmp.ne.s32.totalorder %s68, %s71
      %p77 = scmp.eq.s32.totalorder %s8, 0
      %p78 = por %p76, %p77
      %p79 = scmp.ne.s32.totalorder %s68, %s71
      %p80 = scmp.eq.s32.totalorder %s13, 1
      %p81 = por %p79, %p80
      %p82 = scmp.ne.s32.totalorder %s71, %s72
      %p83 = scmp.eq.s32.totalorder %s13, 0
      %p84 = por %p82, %p83
      %p85 = scmp.ne.s32.totalorder %s71, %s72
      %p86 = scmp.eq.s32.totalorder %s14, 1
      %p87 = por %p85, %p86
      %p89 = scmp.ne.s32.totalorder %s72, %s88
      %p90 = scmp.eq.s32.totalorder %s14, 0
      %p91 = por %p89, %p90
      %s92 = ssub.s32 0, %s16
      %s93 = smul.u32 %s15, %s92
      %s94 = ssub.s32 1, %s15
      %s95 = smul.u32 %s94, %s16
      %s96 = sadd.s32 %s93, %s95
      %s97 = ssub.s32 0, %s23
      %s98 = smul.u32 %s27, %s97
      %s99 = ssub.s32 1, %s27
      %s100 = smul.u32 %s99, %s23
      %s101 = sadd.s32 %s98, %s100
      %s102 = ssub.s32 %s15, %s27
      %s103 = ssub.s32 %s96, %s101
      %s104 = sor.u32 %s102, %s103
      %p105 = scmp.eq.s32.totalorder %s104, 0
      %s107 = sadd.s32 %s106, 1
      %s108 = scalar_select %p105, %s106, %s107
      %p111 = pneg %p105
      %p112 = scmp.eq.s32.totalorder %s8, 1
      %p113 = por %p111, %p112
      %p114 = scmp.ne.s32.totalorder %s106, %s109
      %p115 = scmp.eq.s32.totalorder %s8, 0
      %p116 = por %p114, %p115
      %p117 = scmp.ne.s32.totalorder %s106, %s109
      %p118 = scmp.eq.s32.totalorder %s13, 1
      %p119 = por %p117, %p118
      %p120 = scmp.ne.s32.totalorder %s109, %s110
      %p121 = scmp.eq.s32.totalorder %s13, 0
      %p122 = por %p120, %p121
      %p123 = scmp.ne.s32.totalorder %s109, %s110
      %p124 = scmp.eq.s32.totalorder %s14, 1
      %p125 = por %p123, %p124
      %p127 = scmp.ne.s32.totalorder %s110, %s126
      %p128 = scmp.eq.s32.totalorder %s14, 0
      %p129 = por %p127, %p128
      %p130 = scmp.le.s32.totalorder 1, %s8
      %p131 = scmp.lt.s32.totalorder %s8, 3
      %p132 = pnand %p130, %p131
      %p133 = pneg %p132
      // Predicated region
      $region9: #{bidirectional_lstm_forward.6} parent=5 // pred_check
        _
      $region10: #{bidirectional_lstm_forward.6} parent=5 // pred_check_branch
        %135 = sbr.rel (%p132) target = $region12
      $region11: #{bidirectional_lstm_forward.6} parent=5 // pred_region
        %s136 = ssub.s32 %s8, 1
      $region12: #{bidirectional_lstm_forward.6} parent=5 // pred_fallthru
        _
      %p137 = scmp.lt.s32.totalorder %s8, 2
      // Predicated region
      $region13: #{bidirectional_lstm_forward.6} parent=5 // pred_check
        %p138 = pneg %p137
      $region14: #{bidirectional_lstm_forward.6} parent=5 // pred_check_branch
        %140 = sbr.rel (%p138) target = $region16
      $region15: #{bidirectional_lstm_forward.6} parent=5 // pred_region
        // Predicated region
        $region17: #{bidirectional_lstm_forward.6} parent=15 // pred_check
          %p141 = pneg %p52
        $region18: #{bidirectional_lstm_forward.6} parent=15 // pred_check_branch
          %143 = sbr.rel (%p141) target = $region20
        $region19: #{bidirectional_lstm_forward.6} parent=15 // pred_region
          %s144 = sand.u32 %s42, 1
          %s145 = sand.u32 %s42, 1
          %s146 = smul.addr %s145, 16
          %s147 = scalar_lea.vmem [#allocation4], %s146
          %s148 = ssub.s32 0, %s16
          %s149 = smul.u32 %s15, %s148
          %s150 = ssub.s32 1, %s15
          %s151 = smul.u32 %s150, %s16
          %s152 = sadd.s32 %s149, %s151
          %s153 = smul.u32 8, %s152
          %s154 = smul.addr %s153, 2
          %s155 = sadd.s32 %s15, %s154
          %s156 = smul.addr %s155, 2
          %s157 = scalar_lea.vmem %s0, %s156
          // Predicated region
          $region21: #{bidirectional_lstm_forward.6} parent=19 // pred_check
            _
          $region22: #{bidirectional_lstm_forward.6} parent=19 // pred_check_branch
            %159 = sbr.rel (0) target = $region24
          $region23: #{bidirectional_lstm_forward.6} parent=19 // pred_region
            // Predicated region
            $region25: #{bidirectional_lstm_forward.6} parent=23 // pred_check
              _
            $region26: #{bidirectional_lstm_forward.6} parent=23 // pred_check_branch
              %161 = sbr.rel target = $region28
            $region27: #{bidirectional_lstm_forward.6} parent=23 // pred_region
              // Predicated region
              $region40: #{bidirectional_lstm_forward.6} parent=27 // pred_check
                _
              $region41: #{bidirectional_lstm_forward.6} parent=27 // pred_check_branch
                %191 = sbr.rel (0) target = $region43
              $region42: #{bidirectional_lstm_forward.6} parent=27 // pred_region
                loop: start=0, step=1, limit=1
                $region44: #{bidirectional_lstm_forward.6} parent=42 // loop_pre_header
                  _
                $region45: #{bidirectional_lstm_forward.6} parent=42 // loop_header
                  %s193 = sphi 0, %s197
                  %p194 = scmp.ge.s32.totalorder %s193, 1
                  %s198 = sphi %s157, %s157
                  %s199 = sphi %s147, %s147
                $region46: #{bidirectional_lstm_forward.6} parent=42 // loop_header_branch
                  %196 = sbr.rel (%p194) target = $region50
                $region47: #{bidirectional_lstm_forward.6} parent=42 // loop_body
                  _
                $region48: #{bidirectional_lstm_forward.6} parent=42 // loop_footer
                  %s197 = sadd.s32 1, %s193
                $region49: #{bidirectional_lstm_forward.6} parent=42 // loop_footer_branch
                  %192 = sbr.rel target = $region45
                $region50: #{bidirectional_lstm_forward.6} parent=42 // loop_exit
                  _
                %s201 = ssub.s32 4, 1
                loop: start=0, step=1, limit=1
                $region51: #{bidirectional_lstm_forward.6} parent=42 // loop_pre_header
                  _
                $region52: #{bidirectional_lstm_forward.6} parent=42 // loop_header
                  %s203 = sphi 0, %s207
                  %p204 = scmp.ge.s32.totalorder %s203, 1
                  %s208 = sphi %s157, %s157
                  %s209 = sphi %s147, %s147
                $region53: #{bidirectional_lstm_forward.6} parent=42 // loop_header_branch
                  %206 = sbr.rel (%p204) target = $region57
                $region54: #{bidirectional_lstm_forward.6} parent=42 // loop_body
                  %v210 = vld [vmem:[%s208] sm:%s201]
                  %211 = vst [vmem:[%s209] sm:%s201] %v210
                  %v212 = vld [vmem:[%s208 + $0x4] sm:%s201]
                  %213 = vst [vmem:[%s209 + $0x2] sm:%s201] %v212
                  %v214 = vld [vmem:[%s208 + $0x8] sm:%s201]
                  %215 = vst [vmem:[%s209 + $0x4] sm:%s201] %v214
                  %v216 = vld [vmem:[%s208 + $0xc] sm:%s201]
                  %217 = vst [vmem:[%s209 + $0x6] sm:%s201] %v216
                  %v218 = vld [vmem:[%s208 + $0x10] sm:%s201]
                  %219 = vst [vmem:[%s209 + $0x8] sm:%s201] %v218
                  %v220 = vld [vmem:[%s208 + $0x14] sm:%s201]
                  %221 = vst [vmem:[%s209 + $0xa] sm:%s201] %v220
                  %v222 = vld [vmem:[%s208 + $0x18] sm:%s201]
                  %223 = vst [vmem:[%s209 + $0xc] sm:%s201] %v222
                  %v224 = vld [vmem:[%s208 + $0x1c] sm:%s201]
                  %225 = vst [vmem:[%s209 + $0xe] sm:%s201] %v224
                $region55: #{bidirectional_lstm_forward.6} parent=42 // loop_footer
                  %s207 = sadd.s32 1, %s203
                $region56: #{bidirectional_lstm_forward.6} parent=42 // loop_footer_branch
                  %202 = sbr.rel target = $region52
                $region57: #{bidirectional_lstm_forward.6} parent=42 // loop_exit
                  _
              $region43: #{bidirectional_lstm_forward.6} parent=27 // pred_fallthru
                _
            $region28: #{bidirectional_lstm_forward.6} parent=23 // pred_fallthru
              _
            // Predicated region
            $region29: #{bidirectional_lstm_forward.6} parent=23 // pred_check
              _
            $region30: #{bidirectional_lstm_forward.6} parent=23 // pred_check_branch
              %163 = sbr.rel (0) target = $region32
            $region31: #{bidirectional_lstm_forward.6} parent=23 // pred_region
              %s165 = ssub.s32 4, 1
              loop: start=0, step=1, limit=1
              $region33: #{bidirectional_lstm_forward.6} parent=31 // loop_pre_header
                _
              $region34: #{bidirectional_lstm_forward.6} parent=31 // loop_header
                %s167 = sphi 0, %s171
                %p168 = scmp.ge.s32.totalorder %s167, 1
                %s172 = sphi %s157, %s157
                %s173 = sphi %s147, %s147
              $region35: #{bidirectional_lstm_forward.6} parent=31 // loop_header_branch
                %170 = sbr.rel (%p168) target = $region39
              $region36: #{bidirectional_lstm_forward.6} parent=31 // loop_body
                %v174 = vld [vmem:[%s172] sm:%s165]
                %175 = vst [vmem:[%s173] sm:%s165] %v174
                %v176 = vld [vmem:[%s172 + $0x4] sm:%s165]
                %177 = vst [vmem:[%s173 + $0x2] sm:%s165] %v176
                %v178 = vld [vmem:[%s172 + $0x8] sm:%s165]
                %179 = vst [vmem:[%s173 + $0x4] sm:%s165] %v178
                %v180 = vld [vmem:[%s172 + $0xc] sm:%s165]
                %181 = vst [vmem:[%s173 + $0x6] sm:%s165] %v180
                %v182 = vld [vmem:[%s172 + $0x10] sm:%s165]
                %183 = vst [vmem:[%s173 + $0x8] sm:%s165] %v182
                %v184 = vld [vmem:[%s172 + $0x14] sm:%s165]
                %185 = vst [vmem:[%s173 + $0xa] sm:%s165] %v184
                %v186 = vld [vmem:[%s172 + $0x18] sm:%s165]
                %187 = vst [vmem:[%s173 + $0xc] sm:%s165] %v186
                %v188 = vld [vmem:[%s172 + $0x1c] sm:%s165]
                %189 = vst [vmem:[%s173 + $0xe] sm:%s165] %v188
              $region37: #{bidirectional_lstm_forward.6} parent=31 // loop_footer
                %s171 = sadd.s32 1, %s167
              $region38: #{bidirectional_lstm_forward.6} parent=31 // loop_footer_branch
                %166 = sbr.rel target = $region34
              $region39: #{bidirectional_lstm_forward.6} parent=31 // loop_exit
                _
            $region32: #{bidirectional_lstm_forward.6} parent=23 // pred_fallthru
              _
          $region24: #{bidirectional_lstm_forward.6} parent=19 // pred_fallthru
            _
          %226 = vnop
        $region20: #{bidirectional_lstm_forward.6} parent=15 // pred_fallthru
          _
        // Predicated region
        $region58: #{bidirectional_lstm_forward.6} parent=15 // pred_check
          %p227 = pneg %p78
        $region59: #{bidirectional_lstm_forward.6} parent=15 // pred_check_branch
          %229 = sbr.rel (%p227) target = $region61
        $region60: #{bidirectional_lstm_forward.6} parent=15 // pred_region
          %p230 = scmp.lt.s32.totalorder %s15, 1
          %s231 = scalar_select %p230, %s15, 1
          %s232 = smul.addr %s231, 4
          %s233 = smul.addr %s232, 8
          %s234 = scalar_lea.vmem %s1, %s233
        $region61: #{bidirectional_lstm_forward.6} parent=15 // pred_fallthru
          _
      $region16: #{bidirectional_lstm_forward.6} parent=5 // pred_fallthru
        _
      %p235 = scmp.le.s32.totalorder 1, %s8
      %p236 = scmp.lt.s32.totalorder %s8, 3
      %p237 = pnand %p235, %p236
      %p238 = pneg %p237
      // Predicated region
      $region62: #{bidirectional_lstm_forward.6} parent=5 // pred_check
        _
      $region63: #{bidirectional_lstm_forward.6} parent=5 // pred_check_branch
        %240 = sbr.rel (%p237) target = $region65
      $region64: #{bidirectional_lstm_forward.6} parent=5 // pred_region
        %s241 = ssub.s32 %s8, 1
        %s242 = sand.u32 %s45, 1
        %s243 = sand.u32 %s45, 1
        %s244 = smul.addr %s243, 16
        %s245 = scalar_lea.vmem [#allocation4], %s244
        // Predicated region
        $region66: #{bidirectional_lstm_forward.6} parent=64 // pred_check
          %p246 = pneg %p58
        $region67: #{bidirectional_lstm_forward.6} parent=64 // pred_check_branch
          %248 = sbr.rel (%p246) target = $region69
        $region68: #{bidirectional_lstm_forward.6} parent=64 // pred_region
          _
        $region69: #{bidirectional_lstm_forward.6} parent=64 // pred_fallthru
          _
        %s249 = sand.u32 %s45, 1
        %s250 = sand.u32 %s45, 1
        %s251 = smul.addr %s250, 16
        %s252 = scalar_lea.vmem [#allocation4], %s251
        %p253 = pneg %p58
        %p254 = pneg %p55
        %p255 = scmp.lt.s32.totalorder %s17, 1
        %s256 = scalar_select %p255, %s17, 1
        %s257 = smul.addr %s256, 4
        %s258 = smul.addr %s257, 8
        %s259 = scalar_lea.vmem %s1, %s258
        %p260 = pneg %p84
        %p261 = pneg %p81
        %p262 = pneg %p122
        %p263 = pneg %p119
        %s264 = ssub.s32 0, %s18
        %s265 = smul.u32 %s17, %s264
        %s266 = ssub.s32 1, %s17
        %s267 = smul.u32 %s266, %s18
        %s268 = sadd.s32 %s265, %s267
        %s269 = smul.u32 8, %s268
        %p270 = scmp.lt.s32.totalorder %s17, 1
        %s271 = scalar_select %p270, %s17, 1
        %p272 = scmp.lt.s32.totalorder %s269, 7
        %s273 = scalar_select %p272, %s269, 7
        %s274 = smul.addr %s271, 8
        %s275 = sadd.s32 %s273, %s274
        %s276 = smul.addr %s275, 2
        %s277 = scalar_lea.vmem %s2, %s276
        %s278 = ssub.s32 0, %s18
        %s279 = smul.u32 %s17, %s278
        %s280 = ssub.s32 1, %s17
        %s281 = smul.u32 %s280, %s18
        %s282 = sadd.s32 %s279, %s281
        %s283 = smul.u32 8, %s282
        %p284 = scmp.lt.s32.totalorder %s17, 1
        %s285 = scalar_select %p284, %s17, 1
        %s286 = smul.addr %s285, 4
        %s287 = smul.addr %s286, 8
        %s288 = scalar_lea.vmem %s1, %s287
        %s289 = ssub.s32 0, %s18
        %s290 = smul.u32 %s17, %s289
        %s291 = ssub.s32 1, %s17
        %s292 = smul.u32 %s291, %s18
        %s293 = sadd.s32 %s290, %s292
        %s294 = smul.u32 8, %s293
        %p295 = scmp.lt.s32.totalorder %s17, 1
        %s296 = scalar_select %p295, %s17, 1
        %p297 = scmp.lt.s32.totalorder %s294, 7
        %s298 = scalar_select %p297, %s294, 7
        %s299 = smul.addr %s296, 8
        %s300 = sadd.s32 %s298, %s299
        %s301 = smul.addr %s300, 2
        %s302 = scalar_lea.vmem %s2, %s301
        %s303 = ssub.s32 0, %s18
        %s304 = smul.u32 %s17, %s303
        %s305 = ssub.s32 1, %s17
        %s306 = smul.u32 %s305, %s18
        %s307 = sadd.s32 %s304, %s306
        %s308 = smul.u32 8, %s307
        %p309 = scmp.eq.s32.totalorder %s18, 0
        // Predicated region
        $region70: #{bidirectional_lstm_forward.6} parent=64 // pred_check
          %p310 = pneg %p309
        $region71: #{bidirectional_lstm_forward.6} parent=64 // pred_check_branch
          %312 = sbr.rel (%p310) target = $region73
        $region72: #{bidirectional_lstm_forward.6} parent=64 // pred_region
          %vm313 = vcmask 254976
          %314 = vst.msk [vmem:[#allocation2] sm:$0x3] %vm313, 0.0
          %315 = vst.msk [vmem:[#allocation3] sm:$0x3] %vm313, 0.0
        $region73: #{bidirectional_lstm_forward.6} parent=64 // pred_fallthru
          _
        %v316 = vld [vmem:[%s288] sm:$0xff]
        %v317 = vld [vmem:[%s288 + $0x8] sm:$0xff]
        %v318 = vld [vmem:[%s288 + $0x10] sm:$0xff]
        %v319 = vld [vmem:[%s288 + $0x18] sm:$0xff]
        %s320 = smul.u32 %s17, 7
        %s321 = smul.u32 %s320, 2
        %s322 = scalar_lea.vmem %s245, %s321 [#allocation4]
        %v323 = vld [vmem:[%s322] sm:$0x3]
        %v324 = vld [vmem:[#allocation2] sm:$0x3]
        %vm325 = vcmask 261120
        %v327 = vsel %vm325, %v324, 0
        %329 = vmatpush.msra.mxu0 0.0
        %330 = vmatpush.msra.mxu0 0.0
        %331 = vmatpush.msra.mxu0 0.0
        %332 = vmatpush.msra.mxu0 0.0
        %333 = vmatpush.msra.mxu0 0.0
        %334 = vmatpush.msra.mxu0 0.0
        %335 = vmatpush.msra.mxu0 0.0
        %336 = vmatpush.msra.mxu0 0.0
        %337 = vmatpush.msra.mxu0 0.0
        %338 = vmatpush.msra.mxu0 0.0
        %339 = vmatpush.msra.mxu0 0.0
        %340 = vmatpush.msra.mxu0 0.0
        %341 = vmatpush.msra.mxu0 %v319
        %342 = vmatpush.msra.mxu0 %v318
        %343 = vmatpush.msra.mxu0 %v317
        %344 = vmatpush.msra.mxu0 %v316
        %345 = vmatmul.f32.gmra.mxu0 %v327
        %v346 = vpop.f32.mrf.mxu0
        %v347 = vadd.f32 0.0, %v346
        %348 = vdwg.mxu0
        %v349 = vadd.f32 %v323, %v347
        %v350 = vxor.u32 %v349, 2147483648
        %v351 = vmul.f32 %v350, 1.442695
        %v352 = vpow.pop %v351
        %v353 = vadd.f32 %v352, 1.0
        %v354 = vrcp.pop %v353
        %v355 = vmul.f32 %v353, %v354
        %v356 = vsub.f32 1.0, %v355
        %v357 = vmul.f32 %v354, %v356
        %v358 = vadd.f32 %v354, %v357
        %vm359 = vweird.f32 %v353
        %vm360 = vweird.f32 %v354
        %vm361 = vmor %vm359, %vm360
        %v362 = vsel %vm361, %v354, %v358
        %v363 = vand.u32 2147483647, %v353
        %vm364 = vcmp.eq.f32.partialorder %v363, 8.507059e+37
        %v365 = vand.u32 %v353, 2147483648
        %v366 = vor.u32 1.1754944e-38, %v365
        %v367 = vsel %vm364, %v366, %v362
        %v368 = vmul.f32 1.0, %v367
        %v369 = vtanh.pop %v349
        %v370 = vld [vmem:[#allocation3] sm:$0x3]
        %372 = vrot.lane.b32.xlu0 %v370, 32
        %v373 = vpop.permute.xlu0 %372
        %v375 = vmul.f32 %v368, %v373
        %377 = vrot.lane.b32.xlu0 %v369, 64
        %v378 = vpop.permute.xlu0 %377
        %v380 = vmul.f32 %v368, %v378
        %382 = vrot.lane.b32.xlu0 %v380, 32
        %v383 = vpop.permute.xlu0 %382
        %v385 = vadd.f32 %v375, %v383
        %v386 = vtanh.pop %v385
        %388 = vrot.lane.b32.xlu0 %v386, 64
        %v389 = vpop.permute.xlu0 %388
        %v391 = vmul.f32 %v368, %v389
        %393 = vrot.lane.b32.xlu0 %v385, 96
        %v394 = vpop.permute.xlu0 %393
        %vm396 = vcmask 254976
        %397 = vst.msk [vmem:[#allocation3] sm:$0x3] %vm396, %v394
        %399 = vrot.lane.b32.xlu0 %v391, 32
        %v400 = vpop.permute.xlu0 %399
        %402 = vst.msk [vmem:[#allocation2] sm:$0x3] %vm396, %v400
        %s403 = scalar_lea.vmem %s302, %s321
        %404 = vst.msk [vmem:[%s403] sm:$0x3] %vm396, %v400
        %s405 = smul.u32 %s17, 6
        %s406 = ssub.s32 1, %s17
        %s407 = sadd.s32 %s405, %s406
        %s408 = smul.u32 %s407, 2
        %s409 = scalar_lea.vmem %s245, %s408 [#allocation4]
        %v410 = vld [vmem:[%s409] sm:$0x3]
        %v411 = vld [vmem:[#allocation2] sm:$0x3]
        %v413 = vsel %vm325, %v411, 0
        %415 = vmatpush.msra.mxu0 0.0
        %416 = vmatpush.msra.mxu0 0.0
        %417 = vmatpush.msra.mxu0 0.0
        %418 = vmatpush.msra.mxu0 0.0
        %419 = vmatpush.msra.mxu0 0.0
        %420 = vmatpush.msra.mxu0 0.0
        %421 = vmatpush.msra.mxu0 0.0
        %422 = vmatpush.msra.mxu0 0.0
        %423 = vmatpush.msra.mxu0 0.0
        %424 = vmatpush.msra.mxu0 0.0
        %425 = vmatpush.msra.mxu0 0.0
        %426 = vmatpush.msra.mxu0 0.0
        %427 = vmatpush.msra.mxu0 %v319
        %428 = vmatpush.msra.mxu0 %v318
        %429 = vmatpush.msra.mxu0 %v317
        %430 = vmatpush.msra.mxu0 %v316
        %431 = vmatmul.f32.gmra.mxu0 %v413
        %v432 = vpop.f32.mrf.mxu0
        %v433 = vadd.f32 0.0, %v432
        %434 = vdwg.mxu0
        %v435 = vadd.f32 %v410, %v433
        %v436 = vxor.u32 %v435, 2147483648
        %v437 = vmul.f32 %v436, 1.442695
        %v438 = vpow.pop %v437
        %v439 = vadd.f32 %v438, 1.0
        %v440 = vrcp.pop %v439
        %v441 = vmul.f32 %v439, %v440
        %v442 = vsub.f32 1.0, %v441
        %v443 = vmul.f32 %v440, %v442
        %v444 = vadd.f32 %v440, %v443
        %vm445 = vweird.f32 %v439
        %vm446 = vweird.f32 %v440
        %vm447 = vmor %vm445, %vm446
        %v448 = vsel %vm447, %v440, %v444
        %v449 = vand.u32 2147483647, %v439
        %vm450 = vcmp.eq.f32.partialorder %v449, 8.507059e+37
        %v451 = vand.u32 %v439, 2147483648
        %v452 = vor.u32 1.1754944e-38, %v451
        %v453 = vsel %vm450, %v452, %v448
        %v454 = vmul.f32 1.0, %v453
        %v455 = vtanh.pop %v435
        %v456 = vld [vmem:[#allocation3] sm:$0x3]
        %458 = vrot.lane.b32.xlu0 %v456, 32
        %v459 = vpop.permute.xlu0 %458
        %v461 = vmul.f32 %v454, %v459
        %463 = vrot.lane.b32.xlu0 %v455, 64
        %v464 = vpop.permute.xlu0 %463
        %v466 = vmul.f32 %v454, %v464
        %468 = vrot.lane.b32.xlu0 %v466, 32
        %v469 = vpop.permute.xlu0 %468
        %v471 = vadd.f32 %v461, %v469
        %v472 = vtanh.pop %v471
        %474 = vrot.lane.b32.xlu0 %v472, 64
        %v475 = vpop.permute.xlu0 %474
        %v477 = vmul.f32 %v454, %v475
        %479 = vrot.lane.b32.xlu0 %v471, 96
        %v480 = vpop.permute.xlu0 %479
        %482 = vst.msk [vmem:[#allocation3] sm:$0x3] %vm396, %v480
        %484 = vrot.lane.b32.xlu0 %v477, 32
        %v485 = vpop.permute.xlu0 %484
        %487 = vst.msk [vmem:[#allocation2] sm:$0x3] %vm396, %v485
        %s488 = scalar_lea.vmem %s302, %s408
        %489 = vst.msk [vmem:[%s488] sm:$0x3] %vm396, %v485
        %s490 = smul.u32 %s17, 5
        %s491 = smul.u32 %s406, 2
        %s492 = sadd.s32 %s490, %s491
        %s493 = smul.u32 %s492, 2
        %s494 = scalar_lea.vmem %s245, %s493 [#allocation4]
        %v495 = vld [vmem:[%s494] sm:$0x3]
        %v496 = vld [vmem:[#allocation2] sm:$0x3]
        %v498 = vsel %vm325, %v496, 0
        %500 = vmatpush.msra.mxu0 0.0
        %501 = vmatpush.msra.mxu0 0.0
        %502 = vmatpush.msra.mxu0 0.0
        %503 = vmatpush.msra.mxu0 0.0
        %504 = vmatpush.msra.mxu0 0.0
        %505 = vmatpush.msra.mxu0 0.0
        %506 = vmatpush.msra.mxu0 0.0
        %507 = vmatpush.msra.mxu0 0.0
        %508 = vmatpush.msra.mxu0 0.0
        %509 = vmatpush.msra.mxu0 0.0
        %510 = vmatpush.msra.mxu0 0.0
        %511 = vmatpush.msra.mxu0 0.0
        %512 = vmatpush.msra.mxu0 %v319
        %513 = vmatpush.msra.mxu0 %v318
        %514 = vmatpush.msra.mxu0 %v317
        %515 = vmatpush.msra.mxu0 %v316
        %516 = vmatmul.f32.gmra.mxu0 %v498
        %v517 = vpop.f32.mrf.mxu0
        %v518 = vadd.f32 0.0, %v517
        %519 = vdwg.mxu0
        %v520 = vadd.f32 %v495, %v518
        %v521 = vxor.u32 %v520, 2147483648
        %v522 = vmul.f32 %v521, 1.442695
        %v523 = vpow.pop %v522
        %v524 = vadd.f32 %v523, 1.0
        %v525 = vrcp.pop %v524
        %v526 = vmul.f32 %v524, %v525
        %v527 = vsub.f32 1.0, %v526
        %v528 = vmul.f32 %v525, %v527
        %v529 = vadd.f32 %v525, %v528
        %vm530 = vweird.f32 %v524
        %vm531 = vweird.f32 %v525
        %vm532 = vmor %vm530, %vm531
        %v533 = vsel %vm532, %v525, %v529
        %v534 = vand.u32 2147483647, %v524
        %vm535 = vcmp.eq.f32.partialorder %v534, 8.507059e+37
        %v536 = vand.u32 %v524, 2147483648
        %v537 = vor.u32 1.1754944e-38, %v536
        %v538 = vsel %vm535, %v537, %v533
        %v539 = vmul.f32 1.0, %v538
        %v540 = vtanh.pop %v520
        %v541 = vld [vmem:[#allocation3] sm:$0x3]
        %543 = vrot.lane.b32.xlu0 %v541, 32
        %v544 = vpop.permute.xlu0 %543
        %v546 = vmul.f32 %v539, %v544
        %548 = vrot.lane.b32.xlu0 %v540, 64
        %v549 = vpop.permute.xlu0 %548
        %v551 = vmul.f32 %v539, %v549
        %553 = vrot.lane.b32.xlu0 %v551, 32
        %v554 = vpop.permute.xlu0 %553
        %v556 = vadd.f32 %v546, %v554
        %v557 = vtanh.pop %v556
        %559 = vrot.lane.b32.xlu0 %v557, 64
        %v560 = vpop.permute.xlu0 %559
        %v562 = vmul.f32 %v539, %v560
        %564 = vrot.lane.b32.xlu0 %v556, 96
        %v565 = vpop.permute.xlu0 %564
        %567 = vst.msk [vmem:[#allocation3] sm:$0x3] %vm396, %v565
        %569 = vrot.lane.b32.xlu0 %v562, 32
        %v570 = vpop.permute.xlu0 %569
        %572 = vst.msk [vmem:[#allocation2] sm:$0x3] %vm396, %v570
        %s573 = scalar_lea.vmem %s302, %s493
        %574 = vst.msk [vmem:[%s573] sm:$0x3] %vm396, %v570
        %s575 = smul.u32 %s17, 4
        %s576 = smul.u32 %s406, 3
        %s577 = sadd.s32 %s575, %s576
        %s578 = smul.u32 %s577, 2
        %s579 = scalar_lea.vmem %s245, %s578 [#allocation4]
        %v580 = vld [vmem:[%s579] sm:$0x3]
        %v581 = vld [vmem:[#allocation2] sm:$0x3]
        %v583 = vsel %vm325, %v581, 0
        %585 = vmatpush.msra.mxu0 0.0
        %586 = vmatpush.msra.mxu0 0.0
        %587 = vmatpush.msra.mxu0 0.0
        %588 = vmatpush.msra.mxu0 0.0
        %589 = vmatpush.msra.mxu0 0.0
        %590 = vmatpush.msra.mxu0 0.0
        %591 = vmatpush.msra.mxu0 0.0
        %592 = vmatpush.msra.mxu0 0.0
        %593 = vmatpush.msra.mxu0 0.0
        %594 = vmatpush.msra.mxu0 0.0
        %595 = vmatpush.msra.mxu0 0.0
        %596 = vmatpush.msra.mxu0 0.0
        %597 = vmatpush.msra.mxu0 %v319
        %598 = vmatpush.msra.mxu0 %v318
        %599 = vmatpush.msra.mxu0 %v317
        %600 = vmatpush.msra.mxu0 %v316
        %601 = vmatmul.f32.gmra.mxu0 %v583
        %v602 = vpop.f32.mrf.mxu0
        %v603 = vadd.f32 0.0, %v602
        %604 = vdwg.mxu0
        %v605 = vadd.f32 %v580, %v603
        %v606 = vxor.u32 %v605, 2147483648
        %v607 = vmul.f32 %v606, 1.442695
        %v608 = vpow.pop %v607
        %v609 = vadd.f32 %v608, 1.0
        %v610 = vrcp.pop %v609
        %v611 = vmul.f32 %v609, %v610
        %v612 = vsub.f32 1.0, %v611
        %v613 = vmul.f32 %v610, %v612
        %v614 = vadd.f32 %v610, %v613
        %vm615 = vweird.f32 %v609
        %vm616 = vweird.f32 %v610
        %vm617 = vmor %vm615, %vm616
        %v618 = vsel %vm617, %v610, %v614
        %v619 = vand.u32 2147483647, %v609
        %vm620 = vcmp.eq.f32.partialorder %v619, 8.507059e+37
        %v621 = vand.u32 %v609, 2147483648
        %v622 = vor.u32 1.1754944e-38, %v621
        %v623 = vsel %vm620, %v622, %v618
        %v624 = vmul.f32 1.0, %v623
        %v625 = vtanh.pop %v605
        %v626 = vld [vmem:[#allocation3] sm:$0x3]
        %628 = vrot.lane.b32.xlu0 %v626, 32
        %v629 = vpop.permute.xlu0 %628
        %v631 = vmul.f32 %v624, %v629
        %633 = vrot.lane.b32.xlu0 %v625, 64
        %v634 = vpop.permute.xlu0 %633
        %v636 = vmul.f32 %v624, %v634
        %638 = vrot.lane.b32.xlu0 %v636, 32
        %v639 = vpop.permute.xlu0 %638
        %v641 = vadd.f32 %v631, %v639
        %v642 = vtanh.pop %v641
        %644 = vrot.lane.b32.xlu0 %v642, 64
        %v645 = vpop.permute.xlu0 %644
        %v647 = vmul.f32 %v624, %v645
        %649 = vrot.lane.b32.xlu0 %v641, 96
        %v650 = vpop.permute.xlu0 %649
        %652 = vst.msk [vmem:[#allocation3] sm:$0x3] %vm396, %v650
        %654 = vrot.lane.b32.xlu0 %v647, 32
        %v655 = vpop.permute.xlu0 %654
        %657 = vst.msk [vmem:[#allocation2] sm:$0x3] %vm396, %v655
        %s658 = scalar_lea.vmem %s302, %s578
        %659 = vst.msk [vmem:[%s658] sm:$0x3] %vm396, %v655
        %s660 = smul.u32 %s17, 3
        %s661 = smul.u32 %s406, 4
        %s662 = sadd.s32 %s660, %s661
        %s663 = smul.u32 %s662, 2
        %s664 = scalar_lea.vmem %s245, %s663 [#allocation4]
        %v665 = vld [vmem:[%s664] sm:$0x3]
        %v666 = vld [vmem:[#allocation2] sm:$0x3]
        %v668 = vsel %vm325, %v666, 0
        %670 = vmatpush.msra.mxu0 0.0
        %671 = vmatpush.msra.mxu0 0.0
        %672 = vmatpush.msra.mxu0 0.0
        %673 = vmatpush.msra.mxu0 0.0
        %674 = vmatpush.msra.mxu0 0.0
        %675 = vmatpush.msra.mxu0 0.0
        %676 = vmatpush.msra.mxu0 0.0
        %677 = vmatpush.msra.mxu0 0.0
        %678 = vmatpush.msra.mxu0 0.0
        %679 = vmatpush.msra.mxu0 0.0
        %680 = vmatpush.msra.mxu0 0.0
        %681 = vmatpush.msra.mxu0 0.0
        %682 = vmatpush.msra.mxu0 %v319
        %683 = vmatpush.msra.mxu0 %v318
        %684 = vmatpush.msra.mxu0 %v317
        %685 = vmatpush.msra.mxu0 %v316
        %686 = vmatmul.f32.gmra.mxu0 %v668
        %v687 = vpop.f32.mrf.mxu0
        %v688 = vadd.f32 0.0, %v687
        %689 = vdwg.mxu0
        %v690 = vadd.f32 %v665, %v688
        %v691 = vxor.u32 %v690, 2147483648
        %v692 = vmul.f32 %v691, 1.442695
        %v693 = vpow.pop %v692
        %v694 = vadd.f32 %v693, 1.0
        %v695 = vrcp.pop %v694
        %v696 = vmul.f32 %v694, %v695
        %v697 = vsub.f32 1.0, %v696
        %v698 = vmul.f32 %v695, %v697
        %v699 = vadd.f32 %v695, %v698
        %vm700 = vweird.f32 %v694
        %vm701 = vweird.f32 %v695
        %vm702 = vmor %vm700, %vm701
        %v703 = vsel %vm702, %v695, %v699
        %v704 = vand.u32 2147483647, %v694
        %vm705 = vcmp.eq.f32.partialorder %v704, 8.507059e+37
        %v706 = vand.u32 %v694, 2147483648
        %v707 = vor.u32 1.1754944e-38, %v706
        %v708 = vsel %vm705, %v707, %v703
        %v709 = vmul.f32 1.0, %v708
        %v710 = vtanh.pop %v690
        %v711 = vld [vmem:[#allocation3] sm:$0x3]
        %713 = vrot.lane.b32.xlu0 %v711, 32
        %v714 = vpop.permute.xlu0 %713
        %v716 = vmul.f32 %v709, %v714
        %718 = vrot.lane.b32.xlu0 %v710, 64
        %v719 = vpop.permute.xlu0 %718
        %v721 = vmul.f32 %v709, %v719
        %723 = vrot.lane.b32.xlu0 %v721, 32
        %v724 = vpop.permute.xlu0 %723
        %v726 = vadd.f32 %v716, %v724
        %v727 = vtanh.pop %v726
        %729 = vrot.lane.b32.xlu0 %v727, 64
        %v730 = vpop.permute.xlu0 %729
        %v732 = vmul.f32 %v709, %v730
        %734 = vrot.lane.b32.xlu0 %v726, 96
        %v735 = vpop.permute.xlu0 %734
        %737 = vst.msk [vmem:[#allocation3] sm:$0x3] %vm396, %v735
        %739 = vrot.lane.b32.xlu0 %v732, 32
        %v740 = vpop.permute.xlu0 %739
        %742 = vst.msk [vmem:[#allocation2] sm:$0x3] %vm396, %v740
        %s743 = scalar_lea.vmem %s302, %s663
        %744 = vst.msk [vmem:[%s743] sm:$0x3] %vm396, %v740
        %s745 = smul.u32 %s17, 2
        %s746 = smul.u32 %s406, 5
        %s747 = sadd.s32 %s745, %s746
        %s748 = smul.u32 %s747, 2
        %s749 = scalar_lea.vmem %s245, %s748 [#allocation4]
        %v750 = vld [vmem:[%s749] sm:$0x3]
        %v751 = vld [vmem:[#allocation2] sm:$0x3]
        %v753 = vsel %vm325, %v751, 0
        %755 = vmatpush.msra.mxu0 0.0
        %756 = vmatpush.msra.mxu0 0.0
        %757 = vmatpush.msra.mxu0 0.0
        %758 = vmatpush.msra.mxu0 0.0
        %759 = vmatpush.msra.mxu0 0.0
        %760 = vmatpush.msra.mxu0 0.0
        %761 = vmatpush.msra.mxu0 0.0
        %762 = vmatpush.msra.mxu0 0.0
        %763 = vmatpush.msra.mxu0 0.0
        %764 = vmatpush.msra.mxu0 0.0
        %765 = vmatpush.msra.mxu0 0.0
        %766 = vmatpush.msra.mxu0 0.0
        %767 = vmatpush.msra.mxu0 %v319
        %768 = vmatpush.msra.mxu0 %v318
        %769 = vmatpush.msra.mxu0 %v317
        %770 = vmatpush.msra.mxu0 %v316
        %771 = vmatmul.f32.gmra.mxu0 %v753
        %v772 = vpop.f32.mrf.mxu0
        %v773 = vadd.f32 0.0, %v772
        %774 = vdwg.mxu0
        %v775 = vadd.f32 %v750, %v773
        %v776 = vxor.u32 %v775, 2147483648
        %v777 = vmul.f32 %v776, 1.442695
        %v778 = vpow.pop %v777
        %v779 = vadd.f32 %v778, 1.0
        %v780 = vrcp.pop %v779
        %v781 = vmul.f32 %v779, %v780
        %v782 = vsub.f32 1.0, %v781
        %v783 = vmul.f32 %v780, %v782
        %v784 = vadd.f32 %v780, %v783
        %vm785 = vweird.f32 %v779
        %vm786 = vweird.f32 %v780
        %vm787 = vmor %vm785, %vm786
        %v788 = vsel %vm787, %v780, %v784
        %v789 = vand.u32 2147483647, %v779
        %vm790 = vcmp.eq.f32.partialorder %v789, 8.507059e+37
        %v791 = vand.u32 %v779, 2147483648
        %v792 = vor.u32 1.1754944e-38, %v791
        %v793 = vsel %vm790, %v792, %v788
        %v794 = vmul.f32 1.0, %v793
        %v795 = vtanh.pop %v775
        %v796 = vld [vmem:[#allocation3] sm:$0x3]
        %798 = vrot.lane.b32.xlu0 %v796, 32
        %v799 = vpop.permute.xlu0 %798
        %v801 = vmul.f32 %v794, %v799
        %803 = vrot.lane.b32.xlu0 %v795, 64
        %v804 = vpop.permute.xlu0 %803
        %v806 = vmul.f32 %v794, %v804
        %808 = vrot.lane.b32.xlu0 %v806, 32
        %v809 = vpop.permute.xlu0 %808
        %v811 = vadd.f32 %v801, %v809
        %v812 = vtanh.pop %v811
        %814 = vrot.lane.b32.xlu0 %v812, 64
        %v815 = vpop.permute.xlu0 %814
        %v817 = vmul.f32 %v794, %v815
        %819 = vrot.lane.b32.xlu0 %v811, 96
        %v820 = vpop.permute.xlu0 %819
        %822 = vst.msk [vmem:[#allocation3] sm:$0x3] %vm396, %v820
        %824 = vrot.lane.b32.xlu0 %v817, 32
        %v825 = vpop.permute.xlu0 %824
        %827 = vst.msk [vmem:[#allocation2] sm:$0x3] %vm396, %v825
        %s828 = scalar_lea.vmem %s302, %s748
        %829 = vst.msk [vmem:[%s828] sm:$0x3] %vm396, %v825
        %s830 = smul.u32 %s406, 6
        %s831 = sadd.s32 %s17, %s830
        %s832 = smul.u32 %s831, 2
        %s833 = scalar_lea.vmem %s245, %s832 [#allocation4]
        %v834 = vld [vmem:[%s833] sm:$0x3]
        %v835 = vld [vmem:[#allocation2] sm:$0x3]
        %v837 = vsel %vm325, %v835, 0
        %839 = vmatpush.msra.mxu0 0.0
        %840 = vmatpush.msra.mxu0 0.0
        %841 = vmatpush.msra.mxu0 0.0
        %842 = vmatpush.msra.mxu0 0.0
        %843 = vmatpush.msra.mxu0 0.0
        %844 = vmatpush.msra.mxu0 0.0
        %845 = vmatpush.msra.mxu0 0.0
        %846 = vmatpush.msra.mxu0 0.0
        %847 = vmatpush.msra.mxu0 0.0
        %848 = vmatpush.msra.mxu0 0.0
        %849 = vmatpush.msra.mxu0 0.0
        %850 = vmatpush.msra.mxu0 0.0
        %851 = vmatpush.msra.mxu0 %v319
        %852 = vmatpush.msra.mxu0 %v318
        %853 = vmatpush.msra.mxu0 %v317
        %854 = vmatpush.msra.mxu0 %v316
        %855 = vmatmul.f32.gmra.mxu0 %v837
        %v856 = vpop.f32.mrf.mxu0
        %v857 = vadd.f32 0.0, %v856
        %858 = vdwg.mxu0
        %v859 = vadd.f32 %v834, %v857
        %v860 = vxor.u32 %v859, 2147483648
        %v861 = vmul.f32 %v860, 1.442695
        %v862 = vpow.pop %v861
        %v863 = vadd.f32 %v862, 1.0
        %v864 = vrcp.pop %v863
        %v865 = vmul.f32 %v863, %v864
        %v866 = vsub.f32 1.0, %v865
        %v867 = vmul.f32 %v864, %v866
        %v868 = vadd.f32 %v864, %v867
        %vm869 = vweird.f32 %v863
        %vm870 = vweird.f32 %v864
        %vm871 = vmor %vm869, %vm870
        %v872 = vsel %vm871, %v864, %v868
        %v873 = vand.u32 2147483647, %v863
        %vm874 = vcmp.eq.f32.partialorder %v873, 8.507059e+37
        %v875 = vand.u32 %v863, 2147483648
        %v876 = vor.u32 1.1754944e-38, %v875
        %v877 = vsel %vm874, %v876, %v872
        %v878 = vmul.f32 1.0, %v877
        %v879 = vtanh.pop %v859
        %v880 = vld [vmem:[#allocation3] sm:$0x3]
        %882 = vrot.lane.b32.xlu0 %v880, 32
        %v883 = vpop.permute.xlu0 %882
        %v885 = vmul.f32 %v878, %v883
        %887 = vrot.lane.b32.xlu0 %v879, 64
        %v888 = vpop.permute.xlu0 %887
        %v890 = vmul.f32 %v878, %v888
        %892 = vrot.lane.b32.xlu0 %v890, 32
        %v893 = vpop.permute.xlu0 %892
        %v895 = vadd.f32 %v885, %v893
        %v896 = vtanh.pop %v895
        %898 = vrot.lane.b32.xlu0 %v896, 64
        %v899 = vpop.permute.xlu0 %898
        %v901 = vmul.f32 %v878, %v899
        %903 = vrot.lane.b32.xlu0 %v895, 96
        %v904 = vpop.permute.xlu0 %903
        %906 = vst.msk [vmem:[#allocation3] sm:$0x3] %vm396, %v904
        %908 = vrot.lane.b32.xlu0 %v901, 32
        %v909 = vpop.permute.xlu0 %908
        %911 = vst.msk [vmem:[#allocation2] sm:$0x3] %vm396, %v909
        %s912 = scalar_lea.vmem %s302, %s832
        %913 = vst.msk [vmem:[%s912] sm:$0x3] %vm396, %v909
        %s914 = smul.u32 %s406, 7
        %s915 = smul.u32 %s914, 2
        %s916 = scalar_lea.vmem %s245, %s915 [#allocation4]
        %v917 = vld [vmem:[%s916] sm:$0x3]
        %v918 = vld [vmem:[#allocation2] sm:$0x3]
        %v920 = vsel %vm325, %v918, 0
        %922 = vmatpush.msra.mxu0 0.0
        %923 = vmatpush.msra.mxu0 0.0
        %924 = vmatpush.msra.mxu0 0.0
        %925 = vmatpush.msra.mxu0 0.0
        %926 = vmatpush.msra.mxu0 0.0
        %927 = vmatpush.msra.mxu0 0.0
        %928 = vmatpush.msra.mxu0 0.0
        %929 = vmatpush.msra.mxu0 0.0
        %930 = vmatpush.msra.mxu0 0.0
        %931 = vmatpush.msra.mxu0 0.0
        %932 = vmatpush.msra.mxu0 0.0
        %933 = vmatpush.msra.mxu0 0.0
        %934 = vmatpush.msra.mxu0 %v319
        %935 = vmatpush.msra.mxu0 %v318
        %936 = vmatpush.msra.mxu0 %v317
        %937 = vmatpush.msra.mxu0 %v316
        %938 = vmatmul.f32.gmra.mxu0 %v920
        %v939 = vpop.f32.mrf.mxu0
        %v940 = vadd.f32 0.0, %v939
        %941 = vdwg.mxu0
        %v942 = vadd.f32 %v917, %v940
        %v943 = vxor.u32 %v942, 2147483648
        %v944 = vmul.f32 %v943, 1.442695
        %v945 = vpow.pop %v944
        %v946 = vadd.f32 %v945, 1.0
        %v947 = vrcp.pop %v946
        %v948 = vmul.f32 %v946, %v947
        %v949 = vsub.f32 1.0, %v948
        %v950 = vmul.f32 %v947, %v949
        %v951 = vadd.f32 %v947, %v950
        %vm952 = vweird.f32 %v946
        %vm953 = vweird.f32 %v947
        %vm954 = vmor %vm952, %vm953
        %v955 = vsel %vm954, %v947, %v951
        %v956 = vand.u32 2147483647, %v946
        %vm957 = vcmp.eq.f32.partialorder %v956, 8.507059e+37
        %v958 = vand.u32 %v946, 2147483648
        %v959 = vor.u32 1.1754944e-38, %v958
        %v960 = vsel %vm957, %v959, %v955
        %v961 = vmul.f32 1.0, %v960
        %v962 = vtanh.pop %v942
        %v963 = vld [vmem:[#allocation3] sm:$0x3]
        %965 = vrot.lane.b32.xlu0 %v963, 32
        %v966 = vpop.permute.xlu0 %965
        %v968 = vmul.f32 %v961, %v966
        %970 = vrot.lane.b32.xlu0 %v962, 64
        %v971 = vpop.permute.xlu0 %970
        %v973 = vmul.f32 %v961, %v971
        %975 = vrot.lane.b32.xlu0 %v973, 32
        %v976 = vpop.permute.xlu0 %975
        %v978 = vadd.f32 %v968, %v976
        %v979 = vtanh.pop %v978
        %981 = vrot.lane.b32.xlu0 %v979, 64
        %v982 = vpop.permute.xlu0 %981
        %v984 = vmul.f32 %v961, %v982
        %986 = vrot.lane.b32.xlu0 %v978, 96
        %v987 = vpop.permute.xlu0 %986
        %989 = vst.msk [vmem:[#allocation3] sm:$0x3] %vm396, %v987
        %991 = vrot.lane.b32.xlu0 %v984, 32
        %v992 = vpop.permute.xlu0 %991
        %994 = vst.msk [vmem:[#allocation2] sm:$0x3] %vm396, %v992
        %s995 = scalar_lea.vmem %s302, %s915
        %996 = vst.msk [vmem:[%s995] sm:$0x3] %vm396, %v992
        %s997 = ssub.s32 0, %s18
        %s998 = smul.u32 %s17, %s997
        %s999 = ssub.s32 1, %s17
        %s1000 = smul.u32 %s999, %s18
        %s1001 = sadd.s32 %s998, %s1000
        %s1002 = smul.u32 8, %s1001
        %p1003 = scmp.lt.s32.totalorder %s17, 1
        %s1004 = scalar_select %p1003, %s17, 1
        %p1005 = scmp.lt.s32.totalorder %s1002, 7
        %s1006 = scalar_select %p1005, %s1002, 7
        %s1007 = smul.addr %s1004, 8
        %s1008 = sadd.s32 %s1006, %s1007
        %s1009 = smul.addr %s1008, 2
        %s1010 = scalar_lea.vmem %s2, %s1009
        // Predicated region
        $region74: #{bidirectional_lstm_forward.6} parent=64 // pred_check
          %p1011 = pneg %p119
        $region75: #{bidirectional_lstm_forward.6} parent=64 // pred_check_branch
          %1013 = sbr.rel (%p1011) target = $region77
        $region76: #{bidirectional_lstm_forward.6} parent=64 // pred_region
          %s1014 = ssub.s32 0, %s18
          %s1015 = smul.u32 %s17, %s1014
          %s1016 = ssub.s32 1, %s17
          %s1017 = smul.u32 %s1016, %s18
          %s1018 = sadd.s32 %s1015, %s1017
          %s1019 = smul.u32 8, %s1018
        $region77: #{bidirectional_lstm_forward.6} parent=64 // pred_fallthru
          _
      $region65: #{bidirectional_lstm_forward.6} parent=5 // pred_fallthru
        _
      %p1020 = scmp.le.s32.totalorder 2, %s8
      // Predicated region
      $region78: #{bidirectional_lstm_forward.6} parent=5 // pred_check
        %p1021 = pneg %p1020
      $region79: #{bidirectional_lstm_forward.6} parent=5 // pred_check_branch
        %1023 = sbr.rel (%p1021) target = $region81
      $region80: #{bidirectional_lstm_forward.6} parent=5 // pred_region
        %s1024 = ssub.s32 %s8, 2
        // Predicated region
        $region82: #{bidirectional_lstm_forward.6} parent=80 // pred_check
          %p1025 = pneg %p125
        $region83: #{bidirectional_lstm_forward.6} parent=80 // pred_check_branch
          %1027 = sbr.rel (%p1025) target = $region85
        $region84: #{bidirectional_lstm_forward.6} parent=80 // pred_region
          %s1028 = ssub.s32 0, %s20
          %s1029 = smul.u32 %s19, %s1028
          %s1030 = ssub.s32 1, %s19
          %s1031 = smul.u32 %s1030, %s20
          %s1032 = sadd.s32 %s1029, %s1031
          %s1033 = smul.u32 8, %s1032
          %p1034 = scmp.lt.s32.totalorder %s19, 1
          %s1035 = scalar_select %p1034, %s19, 1
          %p1036 = scmp.lt.s32.totalorder %s1033, 7
          %s1037 = scalar_select %p1036, %s1033, 7
          %s1038 = smul.addr %s1035, 8
          %s1039 = sadd.s32 %s1037, %s1038
          %s1040 = smul.addr %s1039, 2
          %s1041 = scalar_lea.vmem %s2, %s1040
        $region85: #{bidirectional_lstm_forward.6} parent=80 // pred_fallthru
          _
      $region81: #{bidirectional_lstm_forward.6} parent=5 // pred_fallthru
        _
    $region6: #{bidirectional_lstm_forward.6} parent=1 // loop_footer
      %s12 = sadd.s32 1, %s8
    $region7: #{bidirectional_lstm_forward.6} parent=1 // loop_footer_branch
      %7 = sbr.rel target = $region3
    $region8: #{bidirectional_lstm_forward.6} parent=1 // loop_exit
      _

</llo_original>
